<compile_context>
chip_gen: v5e
topology: v5e:2x2
jax: 0.10.0
libtpu: 0.0.40
codegen_flags: <defaults>
</compile_context>

<pallas_src>
import functools

import jax
import jax.numpy as jnp
import numpy as np
from jax.experimental import pallas as pl
from jax.experimental.pallas import tpu as pltpu

EPS = 1e-5
KSIZE = 3  # kernel_size=3, stride=1, dilation=1, padding='same' -> pad 1


def _patcher_kernel(x_ref, wf_ref, bf_ref, o_ref, *, c_pad, wp, seg_out, taps):
  """Fused 3x3 conv x Linear as 9 shifted, transposed MXU matmuls.

  x_ref : (bb, c_pad, seg_in)   normalized activations; channels on sublanes,
                                flattened padded spatial on lanes, zero halo of
                                (wp+1) columns on each side.
  wf_ref: (hid, 9*c_pad)        fused (conv x linear) weights, transposed.
  bf_ref: (hid, 1)              fused bias (b_conv @ W_lin + b_lin), f32.
  o_ref : (bb, hid, seg_out)    out^T indexed by padded-flat pixel (lane-dense).
  """
  bb = x_ref.shape[0]
  hid = o_ref.shape[1]
  bias = bf_ref[...].astype(jnp.float32)                   # (hid, 1)

  for b in range(bb):                                      # static unroll
    acc = jnp.zeros((hid, seg_out), jnp.float32)
    for t, (dh, dw) in enumerate(taps):
      off = dh * wp + dw                                   # static offset
      x_t = x_ref[b, :, off:off + seg_out]                 # (c_pad, seg_out)
      w_t = wf_ref[:, t * c_pad:(t + 1) * c_pad]           # (hid,  c_pad)
      acc = acc + jnp.dot(w_t, x_t, preferred_element_type=jnp.float32)
    o_ref[b, :, :] = (acc + bias).astype(o_ref.dtype)      # unmasked vst


def patcher_forward(x_nchw, gamma, beta, w_conv_hwio, b_conv, w_lin, b_lin, *,
                    compute_dtype=jnp.bfloat16, out_dtype=jnp.float32,
                    batch_block=1):
  """x_nchw: (B, C, H, W) float32 (PyTorch convention). Returns (B, H*W, hid)."""
  B, C, H, W = x_nchw.shape
  dmodel, hid = w_lin.shape
  assert w_conv_hwio.shape == (KSIZE, KSIZE, C, dmodel)
  bb = batch_block
  assert B % bb == 0, "batch_block must divide B"
  nb = B // bb

  Hp, Wp = H + 2, W + 2
  S = Hp * Wp                        # flattened padded spatial size
  pad_lo = Wp + 1                    # halo so every tap slice stays in-bounds
  seg_out = pl.cdiv(S, 128) * 128    # lane-dense output width (multiple of 128)
  seg_in = seg_out + 2 * pad_lo      # input width covers all 9 tap offsets
  c_pad = ((C + 7) // 8) * 8         # pad contraction dim to a sublane tile

  # ---- ChannelNorm (per-pixel LayerNorm over C) in the XLA wrapper --------
  xf = x_nchw.astype(jnp.float32)
  mean = jnp.mean(xf, axis=1, keepdims=True)
  var = jnp.mean((xf - mean) ** 2, axis=1, keepdims=True)   # unbiased=False
  xn = (xf - mean) * jax.lax.rsqrt(var + EPS)
  xn = xn * gamma.reshape(1, C, 1, 1) + beta.reshape(1, C, 1, 1)

  # Zero-pad AFTER the norm ('same' conv border), pad channels to c_pad,
  # flatten spatial onto the lane axis, add the halo columns.
  xn = jnp.pad(xn, ((0, 0), (0, c_pad - C), (1, 1), (1, 1)))     # (B,c_pad,Hp,Wp)
  xflat = xn.reshape(B, c_pad, S)
  xflat = jnp.pad(xflat, ((0, 0), (0, 0), (pad_lo, seg_in - S - pad_lo)))
  xflat = xflat.astype(compute_dtype)

  # ---- fold Linear(dmodel -> hid) into the conv weights (exact algebra) ---
  wf4 = jnp.einsum('hwcd,de->hwce', w_conv_hwio.astype(jnp.float32),
                   w_lin.astype(jnp.float32))                    # (3,3,C,hid)
  wf4 = jnp.pad(wf4, ((0, 0), (0, 0), (0, c_pad - C), (0, 0)))   # (3,3,c_pad,hid)
  # Transposed weight: wfT[:, t*c_pad + c] = wf4[dh, dw, c, :], t = dh*3 + dw.
  wfT = jnp.transpose(wf4, (3, 0, 1, 2)).reshape(hid, KSIZE * KSIZE * c_pad)
  wfT = wfT.astype(compute_dtype)
  bf = (b_conv.astype(jnp.float32) @ w_lin.astype(jnp.float32)
        + b_lin.astype(jnp.float32)).reshape(hid, 1)             # f32

  taps = tuple((dh, dw) for dh in range(KSIZE) for dw in range(KSIZE))
  kernel = functools.partial(_patcher_kernel, c_pad=c_pad, wp=Wp,
                             seg_out=seg_out, taps=taps)

  grid_spec = pltpu.PrefetchScalarGridSpec(
      num_scalar_prefetch=0,
      grid=(nb,),
      in_specs=[
          pl.BlockSpec((bb, c_pad, seg_in), lambda i: (i, 0, 0)),
          pl.BlockSpec((hid, KSIZE * KSIZE * c_pad), lambda i: (0, 0)),
          pl.BlockSpec((hid, 1), lambda i: (0, 0)),
      ],
      out_specs=pl.BlockSpec((bb, hid, seg_out), lambda i: (i, 0, 0)),
  )
  out_t = pl.pallas_call(
      kernel,
      out_shape=jax.ShapeDtypeStruct((B, hid, seg_out), out_dtype),
      grid_spec=grid_spec,
      compiler_params=pltpu.CompilerParams(
          dimension_semantics=("parallel",)),
  )(xflat, wfT, bf)

  # (B, hid, seg_out) -> (B, H*W, hid): drop halo/garbage columns, crop the
  # one-pixel conv border, then transpose back to token-major (tiny XLA op).
  out = out_t[:, :, :S].reshape(B, hid, Hp, Wp)[:, :, 1:H + 1, 1:W + 1]
  out = out.reshape(B, hid, H * W)
  return jnp.transpose(out, (0, 2, 1)).astype(out_dtype)


def patcher_reference(x_nchw, gamma, beta, w_conv_hwio, b_conv, w_lin, b_lin):
  """Pure-JAX reference for correctness checking."""
  x = jnp.transpose(x_nchw, (0, 2, 3, 1)).astype(jnp.float32)  # NHWC
  mean = x.mean(-1, keepdims=True)
  var = ((x - mean) ** 2).mean(-1, keepdims=True)
  xn = (x - mean) / jnp.sqrt(var + EPS) * gamma + beta
  y = jax.lax.conv_general_dilated(
      xn, w_conv_hwio, window_strides=(1, 1), padding="SAME",
      dimension_numbers=("NHWC", "HWIO", "NHWC")) + b_conv
  B, H, W, dm = y.shape
  y = y.reshape(B, H * W, dm)
  return y @ w_lin + b_lin


if __name__ == "__main__":
  # Small, module-consistent shapes: batch=2, dim=4, spatial=16, hid_dim=32.
  B, C, H, W = 2, 4, 16, 16
  hid_dim = 32
  dmodel = hid_dim // 2

  key = jax.random.PRNGKey(0)
  kx, kg, kb, kwc, kbc, kwl, kbl = jax.random.split(key, 7)

  x = jax.random.normal(kx, (B, C, H, W), dtype=jnp.float32)   # NCHW input

  # ChannelNorm params (non-trivial so border handling is actually exercised).
  gamma = 1.0 + 0.1 * jax.random.normal(kg, (C,), jnp.float32)
  beta = 0.1 * jax.random.normal(kb, (C,), jnp.float32)

  # Conv2d(dim, dmodel, 3) weights stored HWIO (PyTorch OIHW -> transpose(2,3,1,0)).
  w_conv = 0.1 * jax.random.normal(kwc, (KSIZE, KSIZE, C, dmodel), jnp.float32)
  b_conv = 0.1 * jax.random.normal(kbc, (dmodel,), jnp.float32)

  # Linear(dmodel, hid_dim) weights stored (in, out) (PyTorch (out,in) -> .T).
  w_lin = 0.1 * jax.random.normal(kwl, (dmodel, hid_dim), jnp.float32)
  b_lin = 0.1 * jax.random.normal(kbl, (hid_dim,), jnp.float32)

  ref = patcher_reference(x, gamma, beta, w_conv, b_conv, w_lin, b_lin)

  # fp32 compute path: exact up to fp32 rounding / weight-fusion reassociation.
  out_f32 = patcher_forward(x, gamma, beta, w_conv, b_conv, w_lin, b_lin,
                            compute_dtype=jnp.float32)
  out_f32 = jax.block_until_ready(out_f32)
  np.testing.assert_allclose(np.asarray(out_f32), np.asarray(ref),
                             rtol=1e-4, atol=2e-3)

  # bf16 MXU path (recommended on v6e/v7x): looser tolerance for bf16 operands.
  out_bf16 = patcher_forward(x, gamma, beta, w_conv, b_conv, w_lin, b_lin,
                             compute_dtype=jnp.bfloat16)
  out_bf16 = jax.block_until_ready(out_bf16)
  np.testing.assert_allclose(np.asarray(out_bf16), np.asarray(ref),
                             rtol=2e-2, atol=3e-2)

  # batch_block > 1 (single grid step, in-kernel batch loop) also supported.
  out_bb2 = patcher_forward(x, gamma, beta, w_conv, b_conv, w_lin, b_lin,
                            compute_dtype=jnp.bfloat16, batch_block=2)
  out_bb2 = jax.block_until_ready(out_bb2)
  np.testing.assert_allclose(np.asarray(out_bb2), np.asarray(ref),
                             rtol=2e-2, atol=3e-2)

  assert out_bf16.shape == (B, H * W, hid_dim)
  print("KERNEL_OK")
</pallas_src>

<mosaic_0001>
module attributes {stable_mosaic.version = 11 : i64} {
  func.func @_patcher_kernel(%arg0: i32, %arg1: memref<1x8x422xf32, #tpu.memory_space<vmem>>, %arg2: memref<32x72xf32, #tpu.memory_space<vmem>>, %arg3: memref<32x1xf32, #tpu.memory_space<vmem>>, %arg4: memref<1x32x384xf32, #tpu.memory_space<vmem>>) attributes {dimension_semantics = [#tpu.dimension_semantics<parallel>], iteration_bounds = array<i64: 2>, scalar_prefetch = 0 : i64, scratch_operands = 0 : i64, tpu.core_type = #tpu.core_type<tc>, window_params = [{transform_indices = @transform_0, window_bounds = array<i64: 1, 8, 422>}, {pipeline_mode = #tpu.pipeline_mode<synchronous>, transform_indices = @transform_1, window_bounds = array<i64: 32, 72>}, {pipeline_mode = #tpu.pipeline_mode<synchronous>, transform_indices = @transform_2, window_bounds = array<i64: 32, 1>}, {transform_indices = @transform_3, window_bounds = array<i64: 1, 32, 384>}]} {
    %c0 = arith.constant 0 : index
    %c0_0 = arith.constant 0 : index
    %0 = vector.load %arg3[%c0, %c0_0] : memref<32x1xf32, #tpu.memory_space<vmem>>, vector<32x1xf32>
    %cst = arith.constant 0.000000e+00 : f32
    %1 = vector.broadcast %cst : f32 to vector<32x384xf32>
    %c0_1 = arith.constant 0 : index
    %c0_2 = arith.constant 0 : index
    %c0_3 = arith.constant 0 : index
    %2 = vector.load %arg1[%c0_1, %c0_2, %c0_3] : memref<1x8x422xf32, #tpu.memory_space<vmem>>, vector<1x8x384xf32>
    %3 = vector.shape_cast %2 : vector<1x8x384xf32> to vector<8x384xf32>
    %c0_4 = arith.constant 0 : index
    %c0_5 = arith.constant 0 : index
    %4 = vector.load %arg2[%c0_4, %c0_5] : memref<32x72xf32, #tpu.memory_space<vmem>>, vector<32x8xf32>
    %cst_6 = arith.constant dense<0.000000e+00> : vector<32x384xf32>
    %5 = tpu.matmul %4, %3, %cst_6 {dimension_numbers = #tpu.dot_dimension_numbers<[1], [0], [0], [1], [0, 0, 1, 1], [], []>} : vector<32x8xf32>, vector<8x384xf32>, vector<32x384xf32> -> vector<32x384xf32>
    %6 = arith.addf %1, %5 : vector<32x384xf32>
    %c0_7 = arith.constant 0 : index
    %c0_8 = arith.constant 0 : index
    %c1 = arith.constant 1 : index
    %7 = vector.load %arg1[%c0_7, %c0_8, %c1] : memref<1x8x422xf32, #tpu.memory_space<vmem>>, vector<1x8x384xf32>
    %8 = vector.shape_cast %7 : vector<1x8x384xf32> to vector<8x384xf32>
    %c0_9 = arith.constant 0 : index
    %c8 = arith.constant 8 : index
    %9 = vector.load %arg2[%c0_9, %c8] : memref<32x72xf32, #tpu.memory_space<vmem>>, vector<32x8xf32>
    %cst_10 = arith.constant dense<0.000000e+00> : vector<32x384xf32>
    %10 = tpu.matmul %9, %8, %cst_10 {dimension_numbers = #tpu.dot_dimension_numbers<[1], [0], [0], [1], [0, 0, 1, 1], [], []>} : vector<32x8xf32>, vector<8x384xf32>, vector<32x384xf32> -> vector<32x384xf32>
    %11 = arith.addf %6, %10 : vector<32x384xf32>
    %c0_11 = arith.constant 0 : index
    %c0_12 = arith.constant 0 : index
    %c2 = arith.constant 2 : index
    %12 = vector.load %arg1[%c0_11, %c0_12, %c2] : memref<1x8x422xf32, #tpu.memory_space<vmem>>, vector<1x8x384xf32>
    %13 = vector.shape_cast %12 : vector<1x8x384xf32> to vector<8x384xf32>
    %c0_13 = arith.constant 0 : index
    %c16 = arith.constant 16 : index
    %14 = vector.load %arg2[%c0_13, %c16] : memref<32x72xf32, #tpu.memory_space<vmem>>, vector<32x8xf32>
    %cst_14 = arith.constant dense<0.000000e+00> : vector<32x384xf32>
    %15 = tpu.matmul %14, %13, %cst_14 {dimension_numbers = #tpu.dot_dimension_numbers<[1], [0], [0], [1], [0, 0, 1, 1], [], []>} : vector<32x8xf32>, vector<8x384xf32>, vector<32x384xf32> -> vector<32x384xf32>
    %16 = arith.addf %11, %15 : vector<32x384xf32>
    %c0_15 = arith.constant 0 : index
    %c0_16 = arith.constant 0 : index
    %c18 = arith.constant 18 : index
    %17 = vector.load %arg1[%c0_15, %c0_16, %c18] : memref<1x8x422xf32, #tpu.memory_space<vmem>>, vector<1x8x384xf32>
    %18 = vector.shape_cast %17 : vector<1x8x384xf32> to vector<8x384xf32>
    %c0_17 = arith.constant 0 : index
    %c24 = arith.constant 24 : index
    %19 = vector.load %arg2[%c0_17, %c24] : memref<32x72xf32, #tpu.memory_space<vmem>>, vector<32x8xf32>
    %cst_18 = arith.constant dense<0.000000e+00> : vector<32x384xf32>
    %20 = tpu.matmul %19, %18, %cst_18 {dimension_numbers = #tpu.dot_dimension_numbers<[1], [0], [0], [1], [0, 0, 1, 1], [], []>} : vector<32x8xf32>, vector<8x384xf32>, vector<32x384xf32> -> vector<32x384xf32>
    %21 = arith.addf %16, %20 : vector<32x384xf32>
    %c0_19 = arith.constant 0 : index
    %c0_20 = arith.constant 0 : index
    %c19 = arith.constant 19 : index
    %22 = vector.load %arg1[%c0_19, %c0_20, %c19] : memref<1x8x422xf32, #tpu.memory_space<vmem>>, vector<1x8x384xf32>
    %23 = vector.shape_cast %22 : vector<1x8x384xf32> to vector<8x384xf32>
    %c0_21 = arith.constant 0 : index
    %c32 = arith.constant 32 : index
    %24 = vector.load %arg2[%c0_21, %c32] : memref<32x72xf32, #tpu.memory_space<vmem>>, vector<32x8xf32>
    %cst_22 = arith.constant dense<0.000000e+00> : vector<32x384xf32>
    %25 = tpu.matmul %24, %23, %cst_22 {dimension_numbers = #tpu.dot_dimension_numbers<[1], [0], [0], [1], [0, 0, 1, 1], [], []>} : vector<32x8xf32>, vector<8x384xf32>, vector<32x384xf32> -> vector<32x384xf32>
    %26 = arith.addf %21, %25 : vector<32x384xf32>
    %c0_23 = arith.constant 0 : index
    %c0_24 = arith.constant 0 : index
    %c20 = arith.constant 20 : index
    %27 = vector.load %arg1[%c0_23, %c0_24, %c20] : memref<1x8x422xf32, #tpu.memory_space<vmem>>, vector<1x8x384xf32>
    %28 = vector.shape_cast %27 : vector<1x8x384xf32> to vector<8x384xf32>
    %c0_25 = arith.constant 0 : index
    %c40 = arith.constant 40 : index
    %29 = vector.load %arg2[%c0_25, %c40] : memref<32x72xf32, #tpu.memory_space<vmem>>, vector<32x8xf32>
    %cst_26 = arith.constant dense<0.000000e+00> : vector<32x384xf32>
    %30 = tpu.matmul %29, %28, %cst_26 {dimension_numbers = #tpu.dot_dimension_numbers<[1], [0], [0], [1], [0, 0, 1, 1], [], []>} : vector<32x8xf32>, vector<8x384xf32>, vector<32x384xf32> -> vector<32x384xf32>
    %31 = arith.addf %26, %30 : vector<32x384xf32>
    %c0_27 = arith.constant 0 : index
    %c0_28 = arith.constant 0 : index
    %c36 = arith.constant 36 : index
    %32 = vector.load %arg1[%c0_27, %c0_28, %c36] : memref<1x8x422xf32, #tpu.memory_space<vmem>>, vector<1x8x384xf32>
    %33 = vector.shape_cast %32 : vector<1x8x384xf32> to vector<8x384xf32>
    %c0_29 = arith.constant 0 : index
    %c48 = arith.constant 48 : index
    %34 = vector.load %arg2[%c0_29, %c48] : memref<32x72xf32, #tpu.memory_space<vmem>>, vector<32x8xf32>
    %cst_30 = arith.constant dense<0.000000e+00> : vector<32x384xf32>
    %35 = tpu.matmul %34, %33, %cst_30 {dimension_numbers = #tpu.dot_dimension_numbers<[1], [0], [0], [1], [0, 0, 1, 1], [], []>} : vector<32x8xf32>, vector<8x384xf32>, vector<32x384xf32> -> vector<32x384xf32>
    %36 = arith.addf %31, %35 : vector<32x384xf32>
    %c0_31 = arith.constant 0 : index
    %c0_32 = arith.constant 0 : index
    %c37 = arith.constant 37 : index
    %37 = vector.load %arg1[%c0_31, %c0_32, %c37] : memref<1x8x422xf32, #tpu.memory_space<vmem>>, vector<1x8x384xf32>
    %38 = vector.shape_cast %37 : vector<1x8x384xf32> to vector<8x384xf32>
    %c0_33 = arith.constant 0 : index
    %c56 = arith.constant 56 : index
    %39 = vector.load %arg2[%c0_33, %c56] : memref<32x72xf32, #tpu.memory_space<vmem>>, vector<32x8xf32>
    %cst_34 = arith.constant dense<0.000000e+00> : vector<32x384xf32>
    %40 = tpu.matmul %39, %38, %cst_34 {dimension_numbers = #tpu.dot_dimension_numbers<[1], [0], [0], [1], [0, 0, 1, 1], [], []>} : vector<32x8xf32>, vector<8x384xf32>, vector<32x384xf32> -> vector<32x384xf32>
    %41 = arith.addf %36, %40 : vector<32x384xf32>
    %c0_35 = arith.constant 0 : index
    %c0_36 = arith.constant 0 : index
    %c38 = arith.constant 38 : index
    %42 = vector.load %arg1[%c0_35, %c0_36, %c38] : memref<1x8x422xf32, #tpu.memory_space<vmem>>, vector<1x8x384xf32>
    %43 = vector.shape_cast %42 : vector<1x8x384xf32> to vector<8x384xf32>
    %c0_37 = arith.constant 0 : index
    %c64 = arith.constant 64 : index
    %44 = vector.load %arg2[%c0_37, %c64] : memref<32x72xf32, #tpu.memory_space<vmem>>, vector<32x8xf32>
    %cst_38 = arith.constant dense<0.000000e+00> : vector<32x384xf32>
    %45 = tpu.matmul %44, %43, %cst_38 {dimension_numbers = #tpu.dot_dimension_numbers<[1], [0], [0], [1], [0, 0, 1, 1], [], []>} : vector<32x8xf32>, vector<8x384xf32>, vector<32x384xf32> -> vector<32x384xf32>
    %46 = arith.addf %41, %45 : vector<32x384xf32>
    %47 = vector.broadcast %0 : vector<32x1xf32> to vector<32x384xf32>
    %48 = arith.addf %46, %47 : vector<32x384xf32>
    %c0_39 = arith.constant 0 : index
    %c0_40 = arith.constant 0 : index
    %c0_41 = arith.constant 0 : index
    %49 = vector.load %arg4[%c0_39, %c0_40, %c0_41] : memref<1x32x384xf32, #tpu.memory_space<vmem>>, vector<1x32x384xf32>
    %50 = vector.shape_cast %49 : vector<1x32x384xf32> to vector<32x384xf32>
    %51 = vector.shape_cast %48 : vector<32x384xf32> to vector<1x32x384xf32>
    tpu.vector_store %arg4[%c0_39, %c0_40, %c0_41], %51 {strides = array<i32>} : memref<1x32x384xf32, #tpu.memory_space<vmem>>, vector<1x32x384xf32>,
    return
  }
  func.func @transform_0(%arg0: i32) -> (i32, i32, i32) {
    %c0_i32 = arith.constant 0 : i32
    %c0_i32_0 = arith.constant 0 : i32
    %c0_i32_1 = arith.constant 0 : i32
    return %arg0, %c0_i32, %c0_i32_0 : i32, i32, i32
  }
  func.func @transform_1(%arg0: i32) -> (i32, i32) {
    %c0_i32 = arith.constant 0 : i32
    %c0_i32_0 = arith.constant 0 : i32
    %c0_i32_1 = arith.constant 0 : i32
    return %c0_i32, %c0_i32_0 : i32, i32
  }
  func.func @transform_2(%arg0: i32) -> (i32, i32) {
    %c0_i32 = arith.constant 0 : i32
    %c0_i32_0 = arith.constant 0 : i32
    %c0_i32_1 = arith.constant 0 : i32
    return %c0_i32, %c0_i32_0 : i32, i32
  }
  func.func @transform_3(%arg0: i32) -> (i32, i32, i32) {
    %c0_i32 = arith.constant 0 : i32
    %c0_i32_0 = arith.constant 0 : i32
    %c0_i32_1 = arith.constant 0 : i32
    return %arg0, %c0_i32, %c0_i32_0 : i32, i32, i32
  }
}

</mosaic_0001>

<llo_original>
// kernel: tpu_custom_call.1
$region0: #{tpu_custom_call.1}
  #allocation0 [shape = 'u32[]', space=smem, size = 0x4, offset = 0x4, fixed_abs, tag = 'smem constant byte address 0x4 - core index']
  #allocation1 [shape = 'u32[72,128]{1,0:T(1,128)}', space=vmem, size = 0x9000, scoped, tag = 'internal scratch']
  %s0 = inlined_call_operand.hbm [shape: f32[2,8,422], index: 0, kind: input, shape index: {}]
  %s1 = inlined_call_operand.vmem [shape: f32[32,72], index: 1, kind: input, shape index: {}]
  %s2 = inlined_call_operand.vmem [shape: f32[32,1], index: 2, kind: input, shape index: {}]
  %s3 = inlined_call_operand.hbm [shape: f32[2,32,384], index: 3, kind: output, shape index: {}]
  %s4 = sld [smem:[#allocation0]]
  $region49: #{tpu_custom_call.1} parent=0
    _
  %s6 = ssub.s32 1, %s4
  %s7 = scalar_select 0, %s6, %s4
  $region1: #{tpu_custom_call.1} parent=0
    #allocation2 [shape = 'u8[32768]{0}', space=vmem, size = 0x8000, scoped, tag = 'input window, operand 0']
    #allocation3 [shape = 's32[2]{0}', space=sflag, size = 0x8, scoped, tag = 'scoped memory for tpu_custom_call.1']
    #allocation4 [shape = 's32[2]{0}', space=sflag, size = 0x8, scoped, tag = 'scoped memory for tpu_custom_call.1']
    #allocation5 [shape = 'u8[98304]{0}', space=vmem, size = 0x18000, scoped, tag = 'output window, operand 0']
    %8 = vsyncpa [#allocation3], 0
    %s9 = scalar_lea.sflag [#allocation3], 1
    %10 = vsyncpa %s9, 0
    %11 = vsyncpa [#allocation4], 0
    %s12 = scalar_lea.sflag [#allocation4], 1
    %13 = vsyncpa %s12, 0
    loop: start=0, step=1, limit=4
    $region2: #{tpu_custom_call.1} parent=1 // loop_pre_header
      _
    $region3: #{tpu_custom_call.1} parent=1 // loop_header
      %s15 = sphi 0, %s19
      %p16 = scmp.ge.s32.totalorder %s15, 4
      %s25 = sphi 0, %s27
      %s28 = sphi 0, %s25
      %s29 = sphi 0, %s28
      %s45 = sphi 0, %s29
      %s49 = sphi 0, %s49
      %s51 = sphi 0, %s49
      %s52 = sphi 0, %s51
      %s66 = sphi 0, %s52
      %s70 = sphi 0, %s70
      %s72 = sphi 0, %s70
      %s73 = sphi 0, %s72
      %s87 = sphi 0, %s73
      %s93 = sphi 0, %s95
      %s96 = sphi 0, %s93
      %s97 = sphi 0, %s96
      %s113 = sphi 0, %s97
    $region4: #{tpu_custom_call.1} parent=1 // loop_header_branch
      %18 = sbr.rel (%p16) target = $region8
    $region5: #{tpu_custom_call.1} parent=1 // loop_body
      %s20 = ssub.s32 %s15, 1
      %s21 = ssub.s32 %s15, 2
      %s22 = sadd.s32 %s15, 1
      %s23 = ssub.s32 %s15, %s22
      %p24 = scmp.eq.s32.totalorder %s23, 0
      %s26 = sadd.s32 %s25, 1
      %s27 = scalar_select %p24, %s25, %s26
      %p30 = pneg %p24
      %p31 = scmp.eq.s32.totalorder %s15, 1
      %p32 = por %p30, %p31
      %p33 = scmp.ne.s32.totalorder %s25, %s28
      %p34 = scmp.eq.s32.totalorder %s15, 0
      %p35 = por %p33, %p34
      %p36 = scmp.ne.s32.totalorder %s25, %s28
      %p37 = scmp.eq.s32.totalorder %s20, 1
      %p38 = por %p36, %p37
      %p39 = scmp.ne.s32.totalorder %s28, %s29
      %p40 = scmp.eq.s32.totalorder %s20, 0
      %p41 = por %p39, %p40
      %p42 = scmp.ne.s32.totalorder %s28, %s29
      %p43 = scmp.eq.s32.totalorder %s21, 1
      %p44 = por %p42, %p43
      %p46 = scmp.ne.s32.totalorder %s29, %s45
      %p47 = scmp.eq.s32.totalorder %s21, 0
      %p48 = por %p46, %p47
      %s50 = sadd.s32 %s49, 1
      %p53 = scmp.eq.s32.totalorder %s15, 1
      %p54 = scmp.ne.s32.totalorder %s49, %s51
      %p55 = scmp.eq.s32.totalorder %s15, 0
      %p56 = por %p54, %p55
      %p57 = scmp.ne.s32.totalorder %s49, %s51
      %p58 = scmp.eq.s32.totalorder %s20, 1
      %p59 = por %p57, %p58
      %p60 = scmp.ne.s32.totalorder %s51, %s52
      %p61 = scmp.eq.s32.totalorder %s20, 0
      %p62 = por %p60, %p61
      %p63 = scmp.ne.s32.totalorder %s51, %s52
      %p64 = scmp.eq.s32.totalorder %s21, 1
      %p65 = por %p63, %p64
      %p67 = scmp.ne.s32.totalorder %s52, %s66
      %p68 = scmp.eq.s32.totalorder %s21, 0
      %p69 = por %p67, %p68
      %s71 = sadd.s32 %s70, 1
      %p74 = scmp.eq.s32.totalorder %s15, 1
      %p75 = scmp.ne.s32.totalorder %s70, %s72
      %p76 = scmp.eq.s32.totalorder %s15, 0
      %p77 = por %p75, %p76
      %p78 = scmp.ne.s32.totalorder %s70, %s72
      %p79 = scmp.eq.s32.totalorder %s20, 1
      %p80 = por %p78, %p79
      %p81 = scmp.ne.s32.totalorder %s72, %s73
      %p82 = scmp.eq.s32.totalorder %s20, 0
      %p83 = por %p81, %p82
      %p84 = scmp.ne.s32.totalorder %s72, %s73
      %p85 = scmp.eq.s32.totalorder %s21, 1
      %p86 = por %p84, %p85
      %p88 = scmp.ne.s32.totalorder %s73, %s87
      %p89 = scmp.eq.s32.totalorder %s21, 0
      %p90 = por %p88, %p89
      %s91 = ssub.s32 %s15, %s22
      %p92 = scmp.eq.s32.totalorder %s91, 0
      %s94 = sadd.s32 %s93, 1
      %s95 = scalar_select %p92, %s93, %s94
      %p98 = pneg %p92
      %p99 = scmp.eq.s32.totalorder %s15, 1
      %p100 = por %p98, %p99
      %p101 = scmp.ne.s32.totalorder %s93, %s96
      %p102 = scmp.eq.s32.totalorder %s15, 0
      %p103 = por %p101, %p102
      %p104 = scmp.ne.s32.totalorder %s93, %s96
      %p105 = scmp.eq.s32.totalorder %s20, 1
      %p106 = por %p104, %p105
      %p107 = scmp.ne.s32.totalorder %s96, %s97
      %p108 = scmp.eq.s32.totalorder %s20, 0
      %p109 = por %p107, %p108
      %p110 = scmp.ne.s32.totalorder %s96, %s97
      %p111 = scmp.eq.s32.totalorder %s21, 1
      %p112 = por %p110, %p111
      %p114 = scmp.ne.s32.totalorder %s97, %s113
      %p115 = scmp.eq.s32.totalorder %s21, 0
      %p116 = por %p114, %p115
      %p117 = scmp.le.s32.totalorder 1, %s15
      %p118 = scmp.lt.s32.totalorder %s15, 3
      %p119 = pnand %p117, %p118
      %p120 = pneg %p119
      // Predicated region
      $region9: #{tpu_custom_call.1} parent=5 // pred_check
        _
      $region10: #{tpu_custom_call.1} parent=5 // pred_check_branch
        %122 = sbr.rel (%p119) target = $region12
      $region11: #{tpu_custom_call.1} parent=5 // pred_region
        %s123 = ssub.s32 %s15, 1
        // Predicated region
        $region13: #{tpu_custom_call.1} parent=11 // pred_check
          %p124 = pneg %p62
        $region14: #{tpu_custom_call.1} parent=11 // pred_check_branch
          %126 = sbr.rel (%p124) target = $region16
        $region15: #{tpu_custom_call.1} parent=11 // pred_region
          _
        $region16: #{tpu_custom_call.1} parent=11 // pred_fallthru
          _
        // Predicated region
        $region17: #{tpu_custom_call.1} parent=11 // pred_check
          %p127 = pneg %p83
        $region18: #{tpu_custom_call.1} parent=11 // pred_check_branch
          %129 = sbr.rel (%p127) target = $region20
        $region19: #{tpu_custom_call.1} parent=11 // pred_region
          _
        $region20: #{tpu_custom_call.1} parent=11 // pred_fallthru
          _
      $region12: #{tpu_custom_call.1} parent=5 // pred_fallthru
        _
      %p130 = scmp.lt.s32.totalorder %s15, 2
      // Predicated region
      $region21: #{tpu_custom_call.1} parent=5 // pred_check
        %p131 = pneg %p130
      $region22: #{tpu_custom_call.1} parent=5 // pred_check_branch
        %133 = sbr.rel (%p131) target = $region24
      $region23: #{tpu_custom_call.1} parent=5 // pred_region
        // Predicated region
        $region25: #{tpu_custom_call.1} parent=23 // pred_check
          %p134 = pneg %p35
        $region26: #{tpu_custom_call.1} parent=23 // pred_check_branch
          %136 = sbr.rel (%p134) target = $region28
        $region27: #{tpu_custom_call.1} parent=23 // pred_region
          %s137 = sand.u32 %s25, 1
          %s138 = scalar_lea.sflag [#allocation3], %s137
          %s139 = sand.u32 %s25, 1
          %s140 = smul.addr %s139, 32
          %s141 = scalar_lea.vmem [#allocation2], %s140
          %143 = vsyncadd %s138, 0
          %s144 = smul.addr %s15, 4
          %s145 = smul.addr %s144, 8
          %s146 = scalar_lea.hbm %s0, %s145
          %s148 = sshll.u32 %s146, 4
          %s149 = int_to_ptr.hbm [resolvable:$true] %s148
          %s150 = sshll.u32 %s141, 4
          %s151 = int_to_ptr.vmem [resolvable:$true] %s150
          %153 = dma.hbm_to_vmem [thread:$0]  %s149, 512, %s151, %s138
        $region28: #{tpu_custom_call.1} parent=23 // pred_fallthru
          _
      $region24: #{tpu_custom_call.1} parent=5 // pred_fallthru
        _
      %p154 = scmp.le.s32.totalorder 1, %s15
      %p155 = scmp.lt.s32.totalorder %s15, 3
      %p156 = pnand %p154, %p155
      %p157 = pneg %p156
      // Predicated region
      $region29: #{tpu_custom_call.1} parent=5 // pred_check
        _
      $region30: #{tpu_custom_call.1} parent=5 // pred_check_branch
        %159 = sbr.rel (%p156) target = $region32
      $region31: #{tpu_custom_call.1} parent=5 // pred_region
        %s160 = ssub.s32 %s15, 1
        %s161 = sand.u32 %s28, 1
        %s162 = scalar_lea.sflag [#allocation3], %s161
        %s163 = sand.u32 %s28, 1
        %s164 = smul.addr %s163, 32
        %s165 = scalar_lea.vmem [#allocation2], %s164
        // Predicated region
        $region33: #{tpu_custom_call.1} parent=31 // pred_check
          %p166 = pneg %p41
        $region34: #{tpu_custom_call.1} parent=31 // pred_check_branch
          %168 = sbr.rel (%p166) target = $region36
        $region35: #{tpu_custom_call.1} parent=31 // pred_region
          %170 = dma.done %s162, 512
        $region36: #{tpu_custom_call.1} parent=31 // pred_fallthru
          _
        %s171 = sand.u32 %s28, 1
        %s172 = scalar_lea.sflag [#allocation3], %s171
        %s173 = sand.u32 %s28, 1
        %s174 = smul.addr %s173, 32
        %s175 = scalar_lea.vmem [#allocation2], %s174
        %p176 = pneg %p41
        %p177 = pneg %p38
        %p178 = pneg %p62
        %p179 = pneg %p59
        %p180 = pneg %p83
        %p181 = pneg %p80
        %p182 = pneg %p109
        %p183 = pneg %p106
        %s184 = sand.u32 %s96, 1
        %s185 = scalar_lea.sflag [#allocation4], %s184
        %s186 = sand.u32 %s96, 1
        %s187 = smul.addr %s186, 96
        %s188 = scalar_lea.vmem [#allocation5], %s187
        %v189 = vld [vmem:[%s2] sm:$0xff]
        %v190 = vld [vmem:[%s2 + $0x8] sm:$0xff]
        %v191 = vld [vmem:[%s2 + $0x10] sm:$0xff]
        %v192 = vld [vmem:[%s2 + $0x18] sm:$0xff]
        %v193 = vld [vmem:[%s165] sm:$0xff]
        %v194 = vld [vmem:[%s165 + $0x8] sm:$0xff]
        %v195 = vld [vmem:[%s165 + $0x10] sm:$0xff]
        %v196 = vld [vmem:[%s1] sm:$0xff]
        %v197 = vld [vmem:[%s1 + $0x8] sm:$0xff]
        %v198 = vld [vmem:[%s1 + $0x10] sm:$0xff]
        %v199 = vld [vmem:[%s1 + $0x18] sm:$0xff]
        %v200 = vld [vmem:[%s165 + $0x18] sm:$0xff]
        %205 = vrot.lane.b32.xlu0 %v196, 120
        %v206 = vpop.permute.xlu0 %205
        %207 = vrot.lane.b32.xlu0 %v197, 120
        %v208 = vpop.permute.xlu0 %207
        %209 = vrot.lane.b32.xlu0 %v198, 120
        %v210 = vpop.permute.xlu0 %209
        %211 = vrot.lane.b32.xlu0 %v199, 120
        %v212 = vpop.permute.xlu0 %211
        %217 = vrot.lane.b32.xlu0 %v193, 127
        %v218 = vpop.permute.xlu0 %217
        %219 = vrot.lane.b32.xlu0 %v194, 127
        %v220 = vpop.permute.xlu0 %219
        %221 = vrot.lane.b32.xlu0 %v195, 127
        %v222 = vpop.permute.xlu0 %221
        %223 = vrot.lane.b32.xlu0 %v200, 127
        %v224 = vpop.permute.xlu0 %223
        %vm225 = vcmask 1039360
        %v226 = vsel %vm225, %v218, %v220
        %v227 = vsel %vm225, %v220, %v222
        %v228 = vsel %vm225, %v222, %v224
        %vm232 = vcmask 64512
        %v233 = vsel %vm232, %v206, 0
        %v235 = vsel %vm232, %v208, 0
        %v237 = vsel %vm232, %v210, 0
        %v239 = vsel %vm232, %v212, 0
        %241 = vmatpush.msra.mxu0 0.0
        %242 = vmatpush.msra.mxu0 0.0
        %243 = vmatpush.msra.mxu0 0.0
        %244 = vmatpush.msra.mxu0 0.0
        %245 = vmatpush.msra.mxu0 0.0
        %246 = vmatpush.msra.mxu0 0.0
        %247 = vmatpush.msra.mxu0 0.0
        %248 = vmatpush.msra.mxu0 0.0
        %249 = vmatpush.msra.mxu0 0.0
        %250 = vmatpush.msra.mxu0 0.0
        %251 = vmatpush.msra.mxu0 0.0
        %252 = vmatpush.msra.mxu0 0.0
        %253 = vmatpush.msra.mxu0 0.0
        %254 = vmatpush.msra.mxu0 0.0
        %255 = vmatpush.msra.mxu0 0.0
        %256 = vmatpush.msra.mxu0 %v226
        %257 = vmatmul.f32.gmra.mxu0 %v233
        %v258 = vpop.f32.mrf.mxu0
        %v259 = vadd.f32 0.0, %v258
        %260 = vmatmul.f32.gmra.mxu0 %v235
        %v261 = vpop.f32.mrf.mxu0
        %v262 = vadd.f32 0.0, %v261
        %263 = vmatmul.f32.gmra.mxu0 %v237
        %v264 = vpop.f32.mrf.mxu0
        %v265 = vadd.f32 0.0, %v264
        %266 = vmatmul.f32.gmra.mxu0 %v239
        %v267 = vpop.f32.mrf.mxu0
        %v268 = vadd.f32 0.0, %v267
        %269 = vdwg.mxu0
        %270 = vmatpush.msra.mxu0 0.0
        %271 = vmatpush.msra.mxu0 0.0
        %272 = vmatpush.msra.mxu0 0.0
        %273 = vmatpush.msra.mxu0 0.0
        %274 = vmatpush.msra.mxu0 0.0
        %275 = vmatpush.msra.mxu0 0.0
        %276 = vmatpush.msra.mxu0 0.0
        %277 = vmatpush.msra.mxu0 0.0
        %278 = vmatpush.msra.mxu0 0.0
        %279 = vmatpush.msra.mxu0 0.0
        %280 = vmatpush.msra.mxu0 0.0
        %281 = vmatpush.msra.mxu0 0.0
        %282 = vmatpush.msra.mxu0 0.0
        %283 = vmatpush.msra.mxu0 0.0
        %284 = vmatpush.msra.mxu0 0.0
        %285 = vmatpush.msra.mxu0 %v227
        %286 = vmatmul.f32.gmra.mxu0 %v233
        %v287 = vpop.f32.mrf.mxu0
        %v288 = vadd.f32 0.0, %v287
        %289 = vmatmul.f32.gmra.mxu0 %v235
        %v290 = vpop.f32.mrf.mxu0
        %v291 = vadd.f32 0.0, %v290
        %292 = vmatmul.f32.gmra.mxu0 %v237
        %v293 = vpop.f32.mrf.mxu0
        %v294 = vadd.f32 0.0, %v293
        %295 = vmatmul.f32.gmra.mxu0 %v239
        %v296 = vpop.f32.mrf.mxu0
        %v297 = vadd.f32 0.0, %v296
        %298 = vdwg.mxu0
        %299 = vmatpush.msra.mxu0 0.0
        %300 = vmatpush.msra.mxu0 0.0
        %301 = vmatpush.msra.mxu0 0.0
        %302 = vmatpush.msra.mxu0 0.0
        %303 = vmatpush.msra.mxu0 0.0
        %304 = vmatpush.msra.mxu0 0.0
        %305 = vmatpush.msra.mxu0 0.0
        %306 = vmatpush.msra.mxu0 0.0
        %307 = vmatpush.msra.mxu0 0.0
        %308 = vmatpush.msra.mxu0 0.0
        %309 = vmatpush.msra.mxu0 0.0
        %310 = vmatpush.msra.mxu0 0.0
        %311 = vmatpush.msra.mxu0 0.0
        %312 = vmatpush.msra.mxu0 0.0
        %313 = vmatpush.msra.mxu0 0.0
        %314 = vmatpush.msra.mxu0 %v228
        %315 = vmatmul.f32.gmra.mxu0 %v233
        %v316 = vpop.f32.mrf.mxu0
        %v317 = vadd.f32 0.0, %v316
        %318 = vmatmul.f32.gmra.mxu0 %v235
        %v319 = vpop.f32.mrf.mxu0
        %v320 = vadd.f32 0.0, %v319
        %321 = vmatmul.f32.gmra.mxu0 %v237
        %v322 = vpop.f32.mrf.mxu0
        %v323 = vadd.f32 0.0, %v322
        %324 = vmatmul.f32.gmra.mxu0 %v239
        %v325 = vpop.f32.mrf.mxu0
        %v326 = vadd.f32 0.0, %v325
        %327 = vdwg.mxu0
        %v328 = vsel %vm232, %v196, 0
        %v330 = vsel %vm232, %v197, 0
        %v332 = vsel %vm232, %v198, 0
        %v334 = vsel %vm232, %v199, 0
        %336 = vmatpush.msra.mxu0 0.0
        %337 = vmatpush.msra.mxu0 0.0
        %338 = vmatpush.msra.mxu0 0.0
        %339 = vmatpush.msra.mxu0 0.0
        %340 = vmatpush.msra.mxu0 0.0
        %341 = vmatpush.msra.mxu0 0.0
        %342 = vmatpush.msra.mxu0 0.0
        %343 = vmatpush.msra.mxu0 0.0
        %344 = vmatpush.msra.mxu0 0.0
        %345 = vmatpush.msra.mxu0 0.0
        %346 = vmatpush.msra.mxu0 0.0
        %347 = vmatpush.msra.mxu0 0.0
        %348 = vmatpush.msra.mxu0 0.0
        %349 = vmatpush.msra.mxu0 0.0
        %350 = vmatpush.msra.mxu0 0.0
        %351 = vmatpush.msra.mxu0 %v193
        %352 = vmatmul.f32.gmra.mxu0 %v328
        %v353 = vpop.f32.mrf.mxu0
        %v354 = vadd.f32 %v259, %v353
        %355 = vmatmul.f32.gmra.mxu0 %v330
        %v356 = vpop.f32.mrf.mxu0
        %v357 = vadd.f32 %v262, %v356
        %358 = vmatmul.f32.gmra.mxu0 %v332
        %v359 = vpop.f32.mrf.mxu0
        %v360 = vadd.f32 %v265, %v359
        %361 = vmatmul.f32.gmra.mxu0 %v334
        %v362 = vpop.f32.mrf.mxu0
        %v363 = vadd.f32 %v268, %v362
        %364 = vdwg.mxu0
        %365 = vmatpush.msra.mxu0 0.0
        %366 = vmatpush.msra.mxu0 0.0
        %367 = vmatpush.msra.mxu0 0.0
        %368 = vmatpush.msra.mxu0 0.0
        %369 = vmatpush.msra.mxu0 0.0
        %370 = vmatpush.msra.mxu0 0.0
        %371 = vmatpush.msra.mxu0 0.0
        %372 = vmatpush.msra.mxu0 0.0
        %373 = vmatpush.msra.mxu0 0.0
        %374 = vmatpush.msra.mxu0 0.0
        %375 = vmatpush.msra.mxu0 0.0
        %376 = vmatpush.msra.mxu0 0.0
        %377 = vmatpush.msra.mxu0 0.0
        %378 = vmatpush.msra.mxu0 0.0
        %379 = vmatpush.msra.mxu0 0.0
        %380 = vmatpush.msra.mxu0 %v194
        %381 = vmatmul.f32.gmra.mxu0 %v328
        %v382 = vpop.f32.mrf.mxu0
        %v383 = vadd.f32 %v288, %v382
        %384 = vmatmul.f32.gmra.mxu0 %v330
        %v385 = vpop.f32.mrf.mxu0
        %v386 = vadd.f32 %v291, %v385
        %387 = vmatmul.f32.gmra.mxu0 %v332
        %v388 = vpop.f32.mrf.mxu0
        %v389 = vadd.f32 %v294, %v388
        %390 = vmatmul.f32.gmra.mxu0 %v334
        %v391 = vpop.f32.mrf.mxu0
        %v392 = vadd.f32 %v297, %v391
        %393 = vdwg.mxu0
        %394 = vmatpush.msra.mxu0 0.0
        %395 = vmatpush.msra.mxu0 0.0
        %396 = vmatpush.msra.mxu0 0.0
        %397 = vmatpush.msra.mxu0 0.0
        %398 = vmatpush.msra.mxu0 0.0
        %399 = vmatpush.msra.mxu0 0.0
        %400 = vmatpush.msra.mxu0 0.0
        %401 = vmatpush.msra.mxu0 0.0
        %402 = vmatpush.msra.mxu0 0.0
        %403 = vmatpush.msra.mxu0 0.0
        %404 = vmatpush.msra.mxu0 0.0
        %405 = vmatpush.msra.mxu0 0.0
        %406 = vmatpush.msra.mxu0 0.0
        %407 = vmatpush.msra.mxu0 0.0
        %408 = vmatpush.msra.mxu0 0.0
        %409 = vmatpush.msra.mxu0 %v195
        %410 = vmatmul.f32.gmra.mxu0 %v328
        %v411 = vpop.f32.mrf.mxu0
        %v412 = vadd.f32 %v317, %v411
        %413 = vmatmul.f32.gmra.mxu0 %v330
        %v414 = vpop.f32.mrf.mxu0
        %v415 = vadd.f32 %v320, %v414
        %416 = vmatmul.f32.gmra.mxu0 %v332
        %v417 = vpop.f32.mrf.mxu0
        %v418 = vadd.f32 %v323, %v417
        %419 = vmatmul.f32.gmra.mxu0 %v334
        %v420 = vpop.f32.mrf.mxu0
        %v421 = vadd.f32 %v326, %v420
        %422 = vdwg.mxu0
        %423 = vrot.lane.b32.xlu0 %v196, 112
        %v424 = vpop.permute.xlu0 %423
        %425 = vrot.lane.b32.xlu0 %v197, 112
        %v426 = vpop.permute.xlu0 %425
        %427 = vrot.lane.b32.xlu0 %v198, 112
        %v428 = vpop.permute.xlu0 %427
        %429 = vrot.lane.b32.xlu0 %v199, 112
        %v430 = vpop.permute.xlu0 %429
        %431 = vrot.lane.b32.xlu0 %v193, 126
        %v432 = vpop.permute.xlu0 %431
        %433 = vrot.lane.b32.xlu0 %v194, 126
        %v434 = vpop.permute.xlu0 %433
        %435 = vrot.lane.b32.xlu0 %v195, 126
        %v436 = vpop.permute.xlu0 %435
        %437 = vrot.lane.b32.xlu0 %v200, 126
        %v438 = vpop.permute.xlu0 %437
        %vm439 = vcmask 1031168
        %v440 = vsel %vm439, %v432, %v434
        %v441 = vsel %vm439, %v434, %v436
        %v442 = vsel %vm439, %v436, %v438
        %v446 = vsel %vm232, %v424, 0
        %v448 = vsel %vm232, %v426, 0
        %v450 = vsel %vm232, %v428, 0
        %v452 = vsel %vm232, %v430, 0
        %454 = vmatpush.msra.mxu0 0.0
        %455 = vmatpush.msra.mxu0 0.0
        %456 = vmatpush.msra.mxu0 0.0
        %457 = vmatpush.msra.mxu0 0.0
        %458 = vmatpush.msra.mxu0 0.0
        %459 = vmatpush.msra.mxu0 0.0
        %460 = vmatpush.msra.mxu0 0.0
        %461 = vmatpush.msra.mxu0 0.0
        %462 = vmatpush.msra.mxu0 0.0
        %463 = vmatpush.msra.mxu0 0.0
        %464 = vmatpush.msra.mxu0 0.0
        %465 = vmatpush.msra.mxu0 0.0
        %466 = vmatpush.msra.mxu0 0.0
        %467 = vmatpush.msra.mxu0 0.0
        %468 = vmatpush.msra.mxu0 0.0
        %469 = vmatpush.msra.mxu0 %v440
        %470 = vmatmul.f32.gmra.mxu0 %v446
        %v471 = vpop.f32.mrf.mxu0
        %v472 = vadd.f32 0.0, %v471
        %473 = vmatmul.f32.gmra.mxu0 %v448
        %v474 = vpop.f32.mrf.mxu0
        %v475 = vadd.f32 0.0, %v474
        %476 = vmatmul.f32.gmra.mxu0 %v450
        %v477 = vpop.f32.mrf.mxu0
        %v478 = vadd.f32 0.0, %v477
        %479 = vmatmul.f32.gmra.mxu0 %v452
        %v480 = vpop.f32.mrf.mxu0
        %v481 = vadd.f32 0.0, %v480
        %482 = vdwg.mxu0
        %483 = vmatpush.msra.mxu0 0.0
        %484 = vmatpush.msra.mxu0 0.0
        %485 = vmatpush.msra.mxu0 0.0
        %486 = vmatpush.msra.mxu0 0.0
        %487 = vmatpush.msra.mxu0 0.0
        %488 = vmatpush.msra.mxu0 0.0
        %489 = vmatpush.msra.mxu0 0.0
        %490 = vmatpush.msra.mxu0 0.0
        %491 = vmatpush.msra.mxu0 0.0
        %492 = vmatpush.msra.mxu0 0.0
        %493 = vmatpush.msra.mxu0 0.0
        %494 = vmatpush.msra.mxu0 0.0
        %495 = vmatpush.msra.mxu0 0.0
        %496 = vmatpush.msra.mxu0 0.0
        %497 = vmatpush.msra.mxu0 0.0
        %498 = vmatpush.msra.mxu0 %v441
        %499 = vmatmul.f32.gmra.mxu0 %v446
        %v500 = vpop.f32.mrf.mxu0
        %v501 = vadd.f32 0.0, %v500
        %502 = vmatmul.f32.gmra.mxu0 %v448
        %v503 = vpop.f32.mrf.mxu0
        %v504 = vadd.f32 0.0, %v503
        %505 = vmatmul.f32.gmra.mxu0 %v450
        %v506 = vpop.f32.mrf.mxu0
        %v507 = vadd.f32 0.0, %v506
        %508 = vmatmul.f32.gmra.mxu0 %v452
        %v509 = vpop.f32.mrf.mxu0
        %v510 = vadd.f32 0.0, %v509
        %511 = vdwg.mxu0
        %512 = vmatpush.msra.mxu0 0.0
        %513 = vmatpush.msra.mxu0 0.0
        %514 = vmatpush.msra.mxu0 0.0
        %515 = vmatpush.msra.mxu0 0.0
        %516 = vmatpush.msra.mxu0 0.0
        %517 = vmatpush.msra.mxu0 0.0
        %518 = vmatpush.msra.mxu0 0.0
        %519 = vmatpush.msra.mxu0 0.0
        %520 = vmatpush.msra.mxu0 0.0
        %521 = vmatpush.msra.mxu0 0.0
        %522 = vmatpush.msra.mxu0 0.0
        %523 = vmatpush.msra.mxu0 0.0
        %524 = vmatpush.msra.mxu0 0.0
        %525 = vmatpush.msra.mxu0 0.0
        %526 = vmatpush.msra.mxu0 0.0
        %527 = vmatpush.msra.mxu0 %v442
        %528 = vmatmul.f32.gmra.mxu0 %v446
        %v529 = vpop.f32.mrf.mxu0
        %v530 = vadd.f32 0.0, %v529
        %531 = vmatmul.f32.gmra.mxu0 %v448
        %v532 = vpop.f32.mrf.mxu0
        %v533 = vadd.f32 0.0, %v532
        %534 = vmatmul.f32.gmra.mxu0 %v450
        %v535 = vpop.f32.mrf.mxu0
        %v536 = vadd.f32 0.0, %v535
        %537 = vmatmul.f32.gmra.mxu0 %v452
        %v538 = vpop.f32.mrf.mxu0
        %v539 = vadd.f32 0.0, %v538
        %540 = vdwg.mxu0
        %v541 = vadd.f32 %v354, %v472
        %v542 = vadd.f32 %v383, %v501
        %v543 = vadd.f32 %v412, %v530
        %v544 = vadd.f32 %v357, %v475
        %v545 = vadd.f32 %v386, %v504
        %v546 = vadd.f32 %v415, %v533
        %v547 = vadd.f32 %v360, %v478
        %v548 = vadd.f32 %v389, %v507
        %v549 = vadd.f32 %v418, %v536
        %v550 = vadd.f32 %v363, %v481
        %v551 = vadd.f32 %v392, %v510
        %v552 = vadd.f32 %v421, %v539
        %553 = vrot.lane.b32.xlu0 %v196, 104
        %v554 = vpop.permute.xlu0 %553
        %555 = vrot.lane.b32.xlu0 %v197, 104
        %v556 = vpop.permute.xlu0 %555
        %557 = vrot.lane.b32.xlu0 %v198, 104
        %v558 = vpop.permute.xlu0 %557
        %559 = vrot.lane.b32.xlu0 %v199, 104
        %v560 = vpop.permute.xlu0 %559
        %561 = vrot.lane.b32.xlu0 %v193, 110
        %v562 = vpop.permute.xlu0 %561
        %563 = vrot.lane.b32.xlu0 %v194, 110
        %v564 = vpop.permute.xlu0 %563
        %565 = vrot.lane.b32.xlu0 %v195, 110
        %v566 = vpop.permute.xlu0 %565
        %567 = vrot.lane.b32.xlu0 %v200, 110
        %v568 = vpop.permute.xlu0 %567
        %vm569 = vcmask 900096
        %v570 = vsel %vm569, %v562, %v564
        %v571 = vsel %vm569, %v564, %v566
        %v572 = vsel %vm569, %v566, %v568
        %v576 = vsel %vm232, %v554, 0
        %v578 = vsel %vm232, %v556, 0
        %v580 = vsel %vm232, %v558, 0
        %v582 = vsel %vm232, %v560, 0
        %584 = vmatpush.msra.mxu0 0.0
        %585 = vmatpush.msra.mxu0 0.0
        %586 = vmatpush.msra.mxu0 0.0
        %587 = vmatpush.msra.mxu0 0.0
        %588 = vmatpush.msra.mxu0 0.0
        %589 = vmatpush.msra.mxu0 0.0
        %590 = vmatpush.msra.mxu0 0.0
        %591 = vmatpush.msra.mxu0 0.0
        %592 = vmatpush.msra.mxu0 0.0
        %593 = vmatpush.msra.mxu0 0.0
        %594 = vmatpush.msra.mxu0 0.0
        %595 = vmatpush.msra.mxu0 0.0
        %596 = vmatpush.msra.mxu0 0.0
        %597 = vmatpush.msra.mxu0 0.0
        %598 = vmatpush.msra.mxu0 0.0
        %599 = vmatpush.msra.mxu0 %v570
        %600 = vmatmul.f32.gmra.mxu0 %v576
        %v601 = vpop.f32.mrf.mxu0
        %v602 = vadd.f32 0.0, %v601
        %603 = vmatmul.f32.gmra.mxu0 %v578
        %v604 = vpop.f32.mrf.mxu0
        %v605 = vadd.f32 0.0, %v604
        %606 = vmatmul.f32.gmra.mxu0 %v580
        %v607 = vpop.f32.mrf.mxu0
        %v608 = vadd.f32 0.0, %v607
        %609 = vmatmul.f32.gmra.mxu0 %v582
        %v610 = vpop.f32.mrf.mxu0
        %v611 = vadd.f32 0.0, %v610
        %612 = vdwg.mxu0
        %613 = vmatpush.msra.mxu0 0.0
        %614 = vmatpush.msra.mxu0 0.0
        %615 = vmatpush.msra.mxu0 0.0
        %616 = vmatpush.msra.mxu0 0.0
        %617 = vmatpush.msra.mxu0 0.0
        %618 = vmatpush.msra.mxu0 0.0
        %619 = vmatpush.msra.mxu0 0.0
        %620 = vmatpush.msra.mxu0 0.0
        %621 = vmatpush.msra.mxu0 0.0
        %622 = vmatpush.msra.mxu0 0.0
        %623 = vmatpush.msra.mxu0 0.0
        %624 = vmatpush.msra.mxu0 0.0
        %625 = vmatpush.msra.mxu0 0.0
        %626 = vmatpush.msra.mxu0 0.0
        %627 = vmatpush.msra.mxu0 0.0
        %628 = vmatpush.msra.mxu0 %v571
        %629 = vmatmul.f32.gmra.mxu0 %v576
        %v630 = vpop.f32.mrf.mxu0
        %v631 = vadd.f32 0.0, %v630
        %632 = vmatmul.f32.gmra.mxu0 %v578
        %v633 = vpop.f32.mrf.mxu0
        %v634 = vadd.f32 0.0, %v633
        %635 = vmatmul.f32.gmra.mxu0 %v580
        %v636 = vpop.f32.mrf.mxu0
        %v637 = vadd.f32 0.0, %v636
        %638 = vmatmul.f32.gmra.mxu0 %v582
        %v639 = vpop.f32.mrf.mxu0
        %v640 = vadd.f32 0.0, %v639
        %641 = vdwg.mxu0
        %642 = vmatpush.msra.mxu0 0.0
        %643 = vmatpush.msra.mxu0 0.0
        %644 = vmatpush.msra.mxu0 0.0
        %645 = vmatpush.msra.mxu0 0.0
        %646 = vmatpush.msra.mxu0 0.0
        %647 = vmatpush.msra.mxu0 0.0
        %648 = vmatpush.msra.mxu0 0.0
        %649 = vmatpush.msra.mxu0 0.0
        %650 = vmatpush.msra.mxu0 0.0
        %651 = vmatpush.msra.mxu0 0.0
        %652 = vmatpush.msra.mxu0 0.0
        %653 = vmatpush.msra.mxu0 0.0
        %654 = vmatpush.msra.mxu0 0.0
        %655 = vmatpush.msra.mxu0 0.0
        %656 = vmatpush.msra.mxu0 0.0
        %657 = vmatpush.msra.mxu0 %v572
        %658 = vmatmul.f32.gmra.mxu0 %v576
        %v659 = vpop.f32.mrf.mxu0
        %v660 = vadd.f32 0.0, %v659
        %661 = vmatmul.f32.gmra.mxu0 %v578
        %v662 = vpop.f32.mrf.mxu0
        %v663 = vadd.f32 0.0, %v662
        %664 = vmatmul.f32.gmra.mxu0 %v580
        %v665 = vpop.f32.mrf.mxu0
        %v666 = vadd.f32 0.0, %v665
        %667 = vmatmul.f32.gmra.mxu0 %v582
        %v668 = vpop.f32.mrf.mxu0
        %v669 = vadd.f32 0.0, %v668
        %670 = vdwg.mxu0
        %v671 = vadd.f32 %v541, %v602
        %v672 = vadd.f32 %v542, %v631
        %v673 = vadd.f32 %v543, %v660
        %v674 = vadd.f32 %v544, %v605
        %v675 = vadd.f32 %v545, %v634
        %v676 = vadd.f32 %v546, %v663
        %v677 = vadd.f32 %v547, %v608
        %v678 = vadd.f32 %v548, %v637
        %v679 = vadd.f32 %v549, %v666
        %v680 = vadd.f32 %v550, %v611
        %v681 = vadd.f32 %v551, %v640
        %v682 = vadd.f32 %v552, %v669
        %683 = vrot.lane.b32.xlu0 %v196, 96
        %v684 = vpop.permute.xlu0 %683
        %685 = vrot.lane.b32.xlu0 %v197, 96
        %v686 = vpop.permute.xlu0 %685
        %687 = vrot.lane.b32.xlu0 %v198, 96
        %v688 = vpop.permute.xlu0 %687
        %689 = vrot.lane.b32.xlu0 %v199, 96
        %v690 = vpop.permute.xlu0 %689
        %691 = vrot.lane.b32.xlu0 %v193, 109
        %v692 = vpop.permute.xlu0 %691
        %693 = vrot.lane.b32.xlu0 %v194, 109
        %v694 = vpop.permute.xlu0 %693
        %695 = vrot.lane.b32.xlu0 %v195, 109
        %v696 = vpop.permute.xlu0 %695
        %697 = vrot.lane.b32.xlu0 %v200, 109
        %v698 = vpop.permute.xlu0 %697
        %vm699 = vcmask 891904
        %v700 = vsel %vm699, %v692, %v694
        %v701 = vsel %vm699, %v694, %v696
        %v702 = vsel %vm699, %v696, %v698
        %v706 = vsel %vm232, %v684, 0
        %v708 = vsel %vm232, %v686, 0
        %v710 = vsel %vm232, %v688, 0
        %v712 = vsel %vm232, %v690, 0
        %714 = vmatpush.msra.mxu0 0.0
        %715 = vmatpush.msra.mxu0 0.0
        %716 = vmatpush.msra.mxu0 0.0
        %717 = vmatpush.msra.mxu0 0.0
        %718 = vmatpush.msra.mxu0 0.0
        %719 = vmatpush.msra.mxu0 0.0
        %720 = vmatpush.msra.mxu0 0.0
        %721 = vmatpush.msra.mxu0 0.0
        %722 = vmatpush.msra.mxu0 0.0
        %723 = vmatpush.msra.mxu0 0.0
        %724 = vmatpush.msra.mxu0 0.0
        %725 = vmatpush.msra.mxu0 0.0
        %726 = vmatpush.msra.mxu0 0.0
        %727 = vmatpush.msra.mxu0 0.0
        %728 = vmatpush.msra.mxu0 0.0
        %729 = vmatpush.msra.mxu0 %v700
        %730 = vmatmul.f32.gmra.mxu0 %v706
        %v731 = vpop.f32.mrf.mxu0
        %v732 = vadd.f32 0.0, %v731
        %733 = vmatmul.f32.gmra.mxu0 %v708
        %v734 = vpop.f32.mrf.mxu0
        %v735 = vadd.f32 0.0, %v734
        %736 = vmatmul.f32.gmra.mxu0 %v710
        %v737 = vpop.f32.mrf.mxu0
        %v738 = vadd.f32 0.0, %v737
        %739 = vmatmul.f32.gmra.mxu0 %v712
        %v740 = vpop.f32.mrf.mxu0
        %v741 = vadd.f32 0.0, %v740
        %742 = vdwg.mxu0
        %743 = vmatpush.msra.mxu0 0.0
        %744 = vmatpush.msra.mxu0 0.0
        %745 = vmatpush.msra.mxu0 0.0
        %746 = vmatpush.msra.mxu0 0.0
        %747 = vmatpush.msra.mxu0 0.0
        %748 = vmatpush.msra.mxu0 0.0
        %749 = vmatpush.msra.mxu0 0.0
        %750 = vmatpush.msra.mxu0 0.0
        %751 = vmatpush.msra.mxu0 0.0
        %752 = vmatpush.msra.mxu0 0.0
        %753 = vmatpush.msra.mxu0 0.0
        %754 = vmatpush.msra.mxu0 0.0
        %755 = vmatpush.msra.mxu0 0.0
        %756 = vmatpush.msra.mxu0 0.0
        %757 = vmatpush.msra.mxu0 0.0
        %758 = vmatpush.msra.mxu0 %v701
        %759 = vmatmul.f32.gmra.mxu0 %v706
        %v760 = vpop.f32.mrf.mxu0
        %v761 = vadd.f32 0.0, %v760
        %762 = vmatmul.f32.gmra.mxu0 %v708
        %v763 = vpop.f32.mrf.mxu0
        %v764 = vadd.f32 0.0, %v763
        %765 = vmatmul.f32.gmra.mxu0 %v710
        %v766 = vpop.f32.mrf.mxu0
        %v767 = vadd.f32 0.0, %v766
        %768 = vmatmul.f32.gmra.mxu0 %v712
        %v769 = vpop.f32.mrf.mxu0
        %v770 = vadd.f32 0.0, %v769
        %771 = vdwg.mxu0
        %772 = vmatpush.msra.mxu0 0.0
        %773 = vmatpush.msra.mxu0 0.0
        %774 = vmatpush.msra.mxu0 0.0
        %775 = vmatpush.msra.mxu0 0.0
        %776 = vmatpush.msra.mxu0 0.0
        %777 = vmatpush.msra.mxu0 0.0
        %778 = vmatpush.msra.mxu0 0.0
        %779 = vmatpush.msra.mxu0 0.0
        %780 = vmatpush.msra.mxu0 0.0
        %781 = vmatpush.msra.mxu0 0.0
        %782 = vmatpush.msra.mxu0 0.0
        %783 = vmatpush.msra.mxu0 0.0
        %784 = vmatpush.msra.mxu0 0.0
        %785 = vmatpush.msra.mxu0 0.0
        %786 = vmatpush.msra.mxu0 0.0
        %787 = vmatpush.msra.mxu0 %v702
        %788 = vmatmul.f32.gmra.mxu0 %v706
        %v789 = vpop.f32.mrf.mxu0
        %v790 = vadd.f32 0.0, %v789
        %791 = vmatmul.f32.gmra.mxu0 %v708
        %v792 = vpop.f32.mrf.mxu0
        %v793 = vadd.f32 0.0, %v792
        %794 = vmatmul.f32.gmra.mxu0 %v710
        %v795 = vpop.f32.mrf.mxu0
        %v796 = vadd.f32 0.0, %v795
        %797 = vmatmul.f32.gmra.mxu0 %v712
        %v798 = vpop.f32.mrf.mxu0
        %v799 = vadd.f32 0.0, %v798
        %800 = vdwg.mxu0
        %v801 = vadd.f32 %v671, %v732
        %v802 = vadd.f32 %v672, %v761
        %v803 = vadd.f32 %v673, %v790
        %v804 = vadd.f32 %v674, %v735
        %v805 = vadd.f32 %v675, %v764
        %v806 = vadd.f32 %v676, %v793
        %v807 = vadd.f32 %v677, %v738
        %v808 = vadd.f32 %v678, %v767
        %v809 = vadd.f32 %v679, %v796
        %v810 = vadd.f32 %v680, %v741
        %v811 = vadd.f32 %v681, %v770
        %v812 = vadd.f32 %v682, %v799
        %813 = vrot.lane.b32.xlu0 %v196, 88
        %v814 = vpop.permute.xlu0 %813
        %815 = vrot.lane.b32.xlu0 %v197, 88
        %v816 = vpop.permute.xlu0 %815
        %817 = vrot.lane.b32.xlu0 %v198, 88
        %v818 = vpop.permute.xlu0 %817
        %819 = vrot.lane.b32.xlu0 %v199, 88
        %v820 = vpop.permute.xlu0 %819
        %821 = vrot.lane.b32.xlu0 %v193, 108
        %v822 = vpop.permute.xlu0 %821
        %823 = vrot.lane.b32.xlu0 %v194, 108
        %v824 = vpop.permute.xlu0 %823
        %825 = vrot.lane.b32.xlu0 %v195, 108
        %v826 = vpop.permute.xlu0 %825
        %827 = vrot.lane.b32.xlu0 %v200, 108
        %v828 = vpop.permute.xlu0 %827
        %vm829 = vcmask 883712
        %v830 = vsel %vm829, %v822, %v824
        %v831 = vsel %vm829, %v824, %v826
        %v832 = vsel %vm829, %v826, %v828
        %v836 = vsel %vm232, %v814, 0
        %v838 = vsel %vm232, %v816, 0
        %v840 = vsel %vm232, %v818, 0
        %v842 = vsel %vm232, %v820, 0
        %844 = vmatpush.msra.mxu0 0.0
        %845 = vmatpush.msra.mxu0 0.0
        %846 = vmatpush.msra.mxu0 0.0
        %847 = vmatpush.msra.mxu0 0.0
        %848 = vmatpush.msra.mxu0 0.0
        %849 = vmatpush.msra.mxu0 0.0
        %850 = vmatpush.msra.mxu0 0.0
        %851 = vmatpush.msra.mxu0 0.0
        %852 = vmatpush.msra.mxu0 0.0
        %853 = vmatpush.msra.mxu0 0.0
        %854 = vmatpush.msra.mxu0 0.0
        %855 = vmatpush.msra.mxu0 0.0
        %856 = vmatpush.msra.mxu0 0.0
        %857 = vmatpush.msra.mxu0 0.0
        %858 = vmatpush.msra.mxu0 0.0
        %859 = vmatpush.msra.mxu0 %v830
        %860 = vmatmul.f32.gmra.mxu0 %v836
        %v861 = vpop.f32.mrf.mxu0
        %v862 = vadd.f32 0.0, %v861
        %863 = vmatmul.f32.gmra.mxu0 %v838
        %v864 = vpop.f32.mrf.mxu0
        %v865 = vadd.f32 0.0, %v864
        %866 = vmatmul.f32.gmra.mxu0 %v840
        %v867 = vpop.f32.mrf.mxu0
        %v868 = vadd.f32 0.0, %v867
        %869 = vmatmul.f32.gmra.mxu0 %v842
        %v870 = vpop.f32.mrf.mxu0
        %v871 = vadd.f32 0.0, %v870
        %872 = vdwg.mxu0
        %873 = vmatpush.msra.mxu0 0.0
        %874 = vmatpush.msra.mxu0 0.0
        %875 = vmatpush.msra.mxu0 0.0
        %876 = vmatpush.msra.mxu0 0.0
        %877 = vmatpush.msra.mxu0 0.0
        %878 = vmatpush.msra.mxu0 0.0
        %879 = vmatpush.msra.mxu0 0.0
        %880 = vmatpush.msra.mxu0 0.0
        %881 = vmatpush.msra.mxu0 0.0
        %882 = vmatpush.msra.mxu0 0.0
        %883 = vmatpush.msra.mxu0 0.0
        %884 = vmatpush.msra.mxu0 0.0
        %885 = vmatpush.msra.mxu0 0.0
        %886 = vmatpush.msra.mxu0 0.0
        %887 = vmatpush.msra.mxu0 0.0
        %888 = vmatpush.msra.mxu0 %v831
        %889 = vmatmul.f32.gmra.mxu0 %v836
        %v890 = vpop.f32.mrf.mxu0
        %v891 = vadd.f32 0.0, %v890
        %892 = vmatmul.f32.gmra.mxu0 %v838
        %v893 = vpop.f32.mrf.mxu0
        %v894 = vadd.f32 0.0, %v893
        %895 = vmatmul.f32.gmra.mxu0 %v840
        %v896 = vpop.f32.mrf.mxu0
        %v897 = vadd.f32 0.0, %v896
        %898 = vmatmul.f32.gmra.mxu0 %v842
        %v899 = vpop.f32.mrf.mxu0
        %v900 = vadd.f32 0.0, %v899
        %901 = vdwg.mxu0
        %902 = vmatpush.msra.mxu0 0.0
        %903 = vmatpush.msra.mxu0 0.0
        %904 = vmatpush.msra.mxu0 0.0
        %905 = vmatpush.msra.mxu0 0.0
        %906 = vmatpush.msra.mxu0 0.0
        %907 = vmatpush.msra.mxu0 0.0
        %908 = vmatpush.msra.mxu0 0.0
        %909 = vmatpush.msra.mxu0 0.0
        %910 = vmatpush.msra.mxu0 0.0
        %911 = vmatpush.msra.mxu0 0.0
        %912 = vmatpush.msra.mxu0 0.0
        %913 = vmatpush.msra.mxu0 0.0
        %914 = vmatpush.msra.mxu0 0.0
        %915 = vmatpush.msra.mxu0 0.0
        %916 = vmatpush.msra.mxu0 0.0
        %917 = vmatpush.msra.mxu0 %v832
        %918 = vmatmul.f32.gmra.mxu0 %v836
        %v919 = vpop.f32.mrf.mxu0
        %v920 = vadd.f32 0.0, %v919
        %921 = vmatmul.f32.gmra.mxu0 %v838
        %v922 = vpop.f32.mrf.mxu0
        %v923 = vadd.f32 0.0, %v922
        %924 = vmatmul.f32.gmra.mxu0 %v840
        %v925 = vpop.f32.mrf.mxu0
        %v926 = vadd.f32 0.0, %v925
        %927 = vmatmul.f32.gmra.mxu0 %v842
        %v928 = vpop.f32.mrf.mxu0
        %v929 = vadd.f32 0.0, %v928
        %930 = vdwg.mxu0
        %v931 = vadd.f32 %v801, %v862
        %v932 = vadd.f32 %v802, %v891
        %v933 = vadd.f32 %v803, %v920
        %v934 = vadd.f32 %v804, %v865
        %v935 = vadd.f32 %v805, %v894
        %v936 = vadd.f32 %v806, %v923
        %v937 = vadd.f32 %v807, %v868
        %v938 = vadd.f32 %v808, %v897
        %v939 = vadd.f32 %v809, %v926
        %v940 = vadd.f32 %v810, %v871
        %v941 = vadd.f32 %v811, %v900
        %v942 = vadd.f32 %v812, %v929
        %943 = vrot.lane.b32.xlu0 %v196, 80
        %v944 = vpop.permute.xlu0 %943
        %945 = vrot.lane.b32.xlu0 %v197, 80
        %v946 = vpop.permute.xlu0 %945
        %947 = vrot.lane.b32.xlu0 %v198, 80
        %v948 = vpop.permute.xlu0 %947
        %949 = vrot.lane.b32.xlu0 %v199, 80
        %v950 = vpop.permute.xlu0 %949
        %951 = vrot.lane.b32.xlu0 %v193, 92
        %v952 = vpop.permute.xlu0 %951
        %953 = vrot.lane.b32.xlu0 %v194, 92
        %v954 = vpop.permute.xlu0 %953
        %955 = vrot.lane.b32.xlu0 %v195, 92
        %v956 = vpop.permute.xlu0 %955
        %957 = vrot.lane.b32.xlu0 %v200, 92
        %v958 = vpop.permute.xlu0 %957
        %vm959 = vcmask 752640
        %v960 = vsel %vm959, %v952, %v954
        %v961 = vsel %vm959, %v954, %v956
        %v962 = vsel %vm959, %v956, %v958
        %v966 = vsel %vm232, %v944, 0
        %v968 = vsel %vm232, %v946, 0
        %v970 = vsel %vm232, %v948, 0
        %v972 = vsel %vm232, %v950, 0
        %974 = vmatpush.msra.mxu0 0.0
        %975 = vmatpush.msra.mxu0 0.0
        %976 = vmatpush.msra.mxu0 0.0
        %977 = vmatpush.msra.mxu0 0.0
        %978 = vmatpush.msra.mxu0 0.0
        %979 = vmatpush.msra.mxu0 0.0
        %980 = vmatpush.msra.mxu0 0.0
        %981 = vmatpush.msra.mxu0 0.0
        %982 = vmatpush.msra.mxu0 0.0
        %983 = vmatpush.msra.mxu0 0.0
        %984 = vmatpush.msra.mxu0 0.0
        %985 = vmatpush.msra.mxu0 0.0
        %986 = vmatpush.msra.mxu0 0.0
        %987 = vmatpush.msra.mxu0 0.0
        %988 = vmatpush.msra.mxu0 0.0
        %989 = vmatpush.msra.mxu0 %v960
        %990 = vmatmul.f32.gmra.mxu0 %v966
        %v991 = vpop.f32.mrf.mxu0
        %v992 = vadd.f32 0.0, %v991
        %993 = vmatmul.f32.gmra.mxu0 %v968
        %v994 = vpop.f32.mrf.mxu0
        %v995 = vadd.f32 0.0, %v994
        %996 = vmatmul.f32.gmra.mxu0 %v970
        %v997 = vpop.f32.mrf.mxu0
        %v998 = vadd.f32 0.0, %v997
        %999 = vmatmul.f32.gmra.mxu0 %v972
        %v1000 = vpop.f32.mrf.mxu0
        %v1001 = vadd.f32 0.0, %v1000
        %1002 = vdwg.mxu0
        %1003 = vmatpush.msra.mxu0 0.0
        %1004 = vmatpush.msra.mxu0 0.0
        %1005 = vmatpush.msra.mxu0 0.0
        %1006 = vmatpush.msra.mxu0 0.0
        %1007 = vmatpush.msra.mxu0 0.0
        %1008 = vmatpush.msra.mxu0 0.0
        %1009 = vmatpush.msra.mxu0 0.0
        %1010 = vmatpush.msra.mxu0 0.0
        %1011 = vmatpush.msra.mxu0 0.0
        %1012 = vmatpush.msra.mxu0 0.0
        %1013 = vmatpush.msra.mxu0 0.0
        %1014 = vmatpush.msra.mxu0 0.0
        %1015 = vmatpush.msra.mxu0 0.0
        %1016 = vmatpush.msra.mxu0 0.0
        %1017 = vmatpush.msra.mxu0 0.0
        %1018 = vmatpush.msra.mxu0 %v961
        %1019 = vmatmul.f32.gmra.mxu0 %v966
        %v1020 = vpop.f32.mrf.mxu0
        %v1021 = vadd.f32 0.0, %v1020
        %1022 = vmatmul.f32.gmra.mxu0 %v968
        %v1023 = vpop.f32.mrf.mxu0
        %v1024 = vadd.f32 0.0, %v1023
        %1025 = vmatmul.f32.gmra.mxu0 %v970
        %v1026 = vpop.f32.mrf.mxu0
        %v1027 = vadd.f32 0.0, %v1026
        %1028 = vmatmul.f32.gmra.mxu0 %v972
        %v1029 = vpop.f32.mrf.mxu0
        %v1030 = vadd.f32 0.0, %v1029
        %1031 = vdwg.mxu0
        %1032 = vmatpush.msra.mxu0 0.0
        %1033 = vmatpush.msra.mxu0 0.0
        %1034 = vmatpush.msra.mxu0 0.0
        %1035 = vmatpush.msra.mxu0 0.0
        %1036 = vmatpush.msra.mxu0 0.0
        %1037 = vmatpush.msra.mxu0 0.0
        %1038 = vmatpush.msra.mxu0 0.0
        %1039 = vmatpush.msra.mxu0 0.0
        %1040 = vmatpush.msra.mxu0 0.0
        %1041 = vmatpush.msra.mxu0 0.0
        %1042 = vmatpush.msra.mxu0 0.0
        %1043 = vmatpush.msra.mxu0 0.0
        %1044 = vmatpush.msra.mxu0 0.0
        %1045 = vmatpush.msra.mxu0 0.0
        %1046 = vmatpush.msra.mxu0 0.0
        %1047 = vmatpush.msra.mxu0 %v962
        %1048 = vmatmul.f32.gmra.mxu0 %v966
        %v1049 = vpop.f32.mrf.mxu0
        %v1050 = vadd.f32 0.0, %v1049
        %1051 = vmatmul.f32.gmra.mxu0 %v968
        %v1052 = vpop.f32.mrf.mxu0
        %v1053 = vadd.f32 0.0, %v1052
        %1054 = vmatmul.f32.gmra.mxu0 %v970
        %v1055 = vpop.f32.mrf.mxu0
        %v1056 = vadd.f32 0.0, %v1055
        %1057 = vmatmul.f32.gmra.mxu0 %v972
        %v1058 = vpop.f32.mrf.mxu0
        %v1059 = vadd.f32 0.0, %v1058
        %1060 = vdwg.mxu0
        %v1061 = vadd.f32 %v931, %v992
        %v1062 = vadd.f32 %v932, %v1021
        %v1063 = vadd.f32 %v933, %v1050
        %v1064 = vadd.f32 %v934, %v995
        %v1065 = vadd.f32 %v935, %v1024
        %v1066 = vadd.f32 %v936, %v1053
        %v1067 = vadd.f32 %v937, %v998
        %v1068 = vadd.f32 %v938, %v1027
        %v1069 = vadd.f32 %v939, %v1056
        %v1070 = vadd.f32 %v940, %v1001
        %v1071 = vadd.f32 %v941, %v1030
        %v1072 = vadd.f32 %v942, %v1059
        %1073 = vrot.lane.b32.xlu0 %v196, 72
        %v1074 = vpop.permute.xlu0 %1073
        %1075 = vrot.lane.b32.xlu0 %v197, 72
        %v1076 = vpop.permute.xlu0 %1075
        %1077 = vrot.lane.b32.xlu0 %v198, 72
        %v1078 = vpop.permute.xlu0 %1077
        %1079 = vrot.lane.b32.xlu0 %v199, 72
        %v1080 = vpop.permute.xlu0 %1079
        %1081 = vrot.lane.b32.xlu0 %v193, 91
        %v1082 = vpop.permute.xlu0 %1081
        %1083 = vrot.lane.b32.xlu0 %v194, 91
        %v1084 = vpop.permute.xlu0 %1083
        %1085 = vrot.lane.b32.xlu0 %v195, 91
        %v1086 = vpop.permute.xlu0 %1085
        %1087 = vrot.lane.b32.xlu0 %v200, 91
        %v1088 = vpop.permute.xlu0 %1087
        %vm1089 = vcmask 744448
        %v1090 = vsel %vm1089, %v1082, %v1084
        %v1091 = vsel %vm1089, %v1084, %v1086
        %v1092 = vsel %vm1089, %v1086, %v1088
        %v1096 = vsel %vm232, %v1074, 0
        %v1098 = vsel %vm232, %v1076, 0
        %v1100 = vsel %vm232, %v1078, 0
        %v1102 = vsel %vm232, %v1080, 0
        %1104 = vmatpush.msra.mxu0 0.0
        %1105 = vmatpush.msra.mxu0 0.0
        %1106 = vmatpush.msra.mxu0 0.0
        %1107 = vmatpush.msra.mxu0 0.0
        %1108 = vmatpush.msra.mxu0 0.0
        %1109 = vmatpush.msra.mxu0 0.0
        %1110 = vmatpush.msra.mxu0 0.0
        %1111 = vmatpush.msra.mxu0 0.0
        %1112 = vmatpush.msra.mxu0 0.0
        %1113 = vmatpush.msra.mxu0 0.0
        %1114 = vmatpush.msra.mxu0 0.0
        %1115 = vmatpush.msra.mxu0 0.0
        %1116 = vmatpush.msra.mxu0 0.0
        %1117 = vmatpush.msra.mxu0 0.0
        %1118 = vmatpush.msra.mxu0 0.0
        %1119 = vmatpush.msra.mxu0 %v1090
        %1120 = vmatmul.f32.gmra.mxu0 %v1096
        %v1121 = vpop.f32.mrf.mxu0
        %v1122 = vadd.f32 0.0, %v1121
        %1123 = vmatmul.f32.gmra.mxu0 %v1098
        %v1124 = vpop.f32.mrf.mxu0
        %v1125 = vadd.f32 0.0, %v1124
        %1126 = vmatmul.f32.gmra.mxu0 %v1100
        %v1127 = vpop.f32.mrf.mxu0
        %v1128 = vadd.f32 0.0, %v1127
        %1129 = vmatmul.f32.gmra.mxu0 %v1102
        %v1130 = vpop.f32.mrf.mxu0
        %v1131 = vadd.f32 0.0, %v1130
        %1132 = vdwg.mxu0
        %1133 = vmatpush.msra.mxu0 0.0
        %1134 = vmatpush.msra.mxu0 0.0
        %1135 = vmatpush.msra.mxu0 0.0
        %1136 = vmatpush.msra.mxu0 0.0
        %1137 = vmatpush.msra.mxu0 0.0
        %1138 = vmatpush.msra.mxu0 0.0
        %1139 = vmatpush.msra.mxu0 0.0
        %1140 = vmatpush.msra.mxu0 0.0
        %1141 = vmatpush.msra.mxu0 0.0
        %1142 = vmatpush.msra.mxu0 0.0
        %1143 = vmatpush.msra.mxu0 0.0
        %1144 = vmatpush.msra.mxu0 0.0
        %1145 = vmatpush.msra.mxu0 0.0
        %1146 = vmatpush.msra.mxu0 0.0
        %1147 = vmatpush.msra.mxu0 0.0
        %1148 = vmatpush.msra.mxu0 %v1091
        %1149 = vmatmul.f32.gmra.mxu0 %v1096
        %v1150 = vpop.f32.mrf.mxu0
        %v1151 = vadd.f32 0.0, %v1150
        %1152 = vmatmul.f32.gmra.mxu0 %v1098
        %v1153 = vpop.f32.mrf.mxu0
        %v1154 = vadd.f32 0.0, %v1153
        %1155 = vmatmul.f32.gmra.mxu0 %v1100
        %v1156 = vpop.f32.mrf.mxu0
        %v1157 = vadd.f32 0.0, %v1156
        %1158 = vmatmul.f32.gmra.mxu0 %v1102
        %v1159 = vpop.f32.mrf.mxu0
        %v1160 = vadd.f32 0.0, %v1159
        %1161 = vdwg.mxu0
        %1162 = vmatpush.msra.mxu0 0.0
        %1163 = vmatpush.msra.mxu0 0.0
        %1164 = vmatpush.msra.mxu0 0.0
        %1165 = vmatpush.msra.mxu0 0.0
        %1166 = vmatpush.msra.mxu0 0.0
        %1167 = vmatpush.msra.mxu0 0.0
        %1168 = vmatpush.msra.mxu0 0.0
        %1169 = vmatpush.msra.mxu0 0.0
        %1170 = vmatpush.msra.mxu0 0.0
        %1171 = vmatpush.msra.mxu0 0.0
        %1172 = vmatpush.msra.mxu0 0.0
        %1173 = vmatpush.msra.mxu0 0.0
        %1174 = vmatpush.msra.mxu0 0.0
        %1175 = vmatpush.msra.mxu0 0.0
        %1176 = vmatpush.msra.mxu0 0.0
        %1177 = vmatpush.msra.mxu0 %v1092
        %1178 = vmatmul.f32.gmra.mxu0 %v1096
        %v1179 = vpop.f32.mrf.mxu0
        %v1180 = vadd.f32 0.0, %v1179
        %1181 = vmatmul.f32.gmra.mxu0 %v1098
        %v1182 = vpop.f32.mrf.mxu0
        %v1183 = vadd.f32 0.0, %v1182
        %1184 = vmatmul.f32.gmra.mxu0 %v1100
        %v1185 = vpop.f32.mrf.mxu0
        %v1186 = vadd.f32 0.0, %v1185
        %1187 = vmatmul.f32.gmra.mxu0 %v1102
        %v1188 = vpop.f32.mrf.mxu0
        %v1189 = vadd.f32 0.0, %v1188
        %1190 = vdwg.mxu0
        %v1191 = vadd.f32 %v1061, %v1122
        %v1192 = vadd.f32 %v1062, %v1151
        %v1193 = vadd.f32 %v1063, %v1180
        %v1194 = vadd.f32 %v1064, %v1125
        %v1195 = vadd.f32 %v1065, %v1154
        %v1196 = vadd.f32 %v1066, %v1183
        %v1197 = vadd.f32 %v1067, %v1128
        %v1198 = vadd.f32 %v1068, %v1157
        %v1199 = vadd.f32 %v1069, %v1186
        %v1200 = vadd.f32 %v1070, %v1131
        %v1201 = vadd.f32 %v1071, %v1160
        %v1202 = vadd.f32 %v1072, %v1189
        %1203 = vrot.lane.b32.xlu0 %v196, 64
        %v1204 = vpop.permute.xlu0 %1203
        %1205 = vrot.lane.b32.xlu0 %v197, 64
        %v1206 = vpop.permute.xlu0 %1205
        %1207 = vrot.lane.b32.xlu0 %v198, 64
        %v1208 = vpop.permute.xlu0 %1207
        %1209 = vrot.lane.b32.xlu0 %v199, 64
        %v1210 = vpop.permute.xlu0 %1209
        %1211 = vrot.lane.b32.xlu0 %v193, 90
        %v1212 = vpop.permute.xlu0 %1211
        %1213 = vrot.lane.b32.xlu0 %v194, 90
        %v1214 = vpop.permute.xlu0 %1213
        %1215 = vrot.lane.b32.xlu0 %v195, 90
        %v1216 = vpop.permute.xlu0 %1215
        %1217 = vrot.lane.b32.xlu0 %v200, 90
        %v1218 = vpop.permute.xlu0 %1217
        %vm1219 = vcmask 736256
        %v1220 = vsel %vm1219, %v1212, %v1214
        %v1221 = vsel %vm1219, %v1214, %v1216
        %v1222 = vsel %vm1219, %v1216, %v1218
        %v1226 = vsel %vm232, %v1204, 0
        %v1228 = vsel %vm232, %v1206, 0
        %v1230 = vsel %vm232, %v1208, 0
        %v1232 = vsel %vm232, %v1210, 0
        %1234 = vmatpush.msra.mxu0 0.0
        %1235 = vmatpush.msra.mxu0 0.0
        %1236 = vmatpush.msra.mxu0 0.0
        %1237 = vmatpush.msra.mxu0 0.0
        %1238 = vmatpush.msra.mxu0 0.0
        %1239 = vmatpush.msra.mxu0 0.0
        %1240 = vmatpush.msra.mxu0 0.0
        %1241 = vmatpush.msra.mxu0 0.0
        %1242 = vmatpush.msra.mxu0 0.0
        %1243 = vmatpush.msra.mxu0 0.0
        %1244 = vmatpush.msra.mxu0 0.0
        %1245 = vmatpush.msra.mxu0 0.0
        %1246 = vmatpush.msra.mxu0 0.0
        %1247 = vmatpush.msra.mxu0 0.0
        %1248 = vmatpush.msra.mxu0 0.0
        %1249 = vmatpush.msra.mxu0 %v1220
        %1250 = vmatmul.f32.gmra.mxu0 %v1226
        %v1251 = vpop.f32.mrf.mxu0
        %v1252 = vadd.f32 0.0, %v1251
        %1253 = vmatmul.f32.gmra.mxu0 %v1228
        %v1254 = vpop.f32.mrf.mxu0
        %v1255 = vadd.f32 0.0, %v1254
        %1256 = vmatmul.f32.gmra.mxu0 %v1230
        %v1257 = vpop.f32.mrf.mxu0
        %v1258 = vadd.f32 0.0, %v1257
        %1259 = vmatmul.f32.gmra.mxu0 %v1232
        %v1260 = vpop.f32.mrf.mxu0
        %v1261 = vadd.f32 0.0, %v1260
        %1262 = vdwg.mxu0
        %1263 = vmatpush.msra.mxu0 0.0
        %1264 = vmatpush.msra.mxu0 0.0
        %1265 = vmatpush.msra.mxu0 0.0
        %1266 = vmatpush.msra.mxu0 0.0
        %1267 = vmatpush.msra.mxu0 0.0
        %1268 = vmatpush.msra.mxu0 0.0
        %1269 = vmatpush.msra.mxu0 0.0
        %1270 = vmatpush.msra.mxu0 0.0
        %1271 = vmatpush.msra.mxu0 0.0
        %1272 = vmatpush.msra.mxu0 0.0
        %1273 = vmatpush.msra.mxu0 0.0
        %1274 = vmatpush.msra.mxu0 0.0
        %1275 = vmatpush.msra.mxu0 0.0
        %1276 = vmatpush.msra.mxu0 0.0
        %1277 = vmatpush.msra.mxu0 0.0
        %1278 = vmatpush.msra.mxu0 %v1221
        %1279 = vmatmul.f32.gmra.mxu0 %v1226
        %v1280 = vpop.f32.mrf.mxu0
        %v1281 = vadd.f32 0.0, %v1280
        %1282 = vmatmul.f32.gmra.mxu0 %v1228
        %v1283 = vpop.f32.mrf.mxu0
        %v1284 = vadd.f32 0.0, %v1283
        %1285 = vmatmul.f32.gmra.mxu0 %v1230
        %v1286 = vpop.f32.mrf.mxu0
        %v1287 = vadd.f32 0.0, %v1286
        %1288 = vmatmul.f32.gmra.mxu0 %v1232
        %v1289 = vpop.f32.mrf.mxu0
        %v1290 = vadd.f32 0.0, %v1289
        %1291 = vdwg.mxu0
        %1292 = vmatpush.msra.mxu0 0.0
        %1293 = vmatpush.msra.mxu0 0.0
        %1294 = vmatpush.msra.mxu0 0.0
        %1295 = vmatpush.msra.mxu0 0.0
        %1296 = vmatpush.msra.mxu0 0.0
        %1297 = vmatpush.msra.mxu0 0.0
        %1298 = vmatpush.msra.mxu0 0.0
        %1299 = vmatpush.msra.mxu0 0.0
        %1300 = vmatpush.msra.mxu0 0.0
        %1301 = vmatpush.msra.mxu0 0.0
        %1302 = vmatpush.msra.mxu0 0.0
        %1303 = vmatpush.msra.mxu0 0.0
        %1304 = vmatpush.msra.mxu0 0.0
        %1305 = vmatpush.msra.mxu0 0.0
        %1306 = vmatpush.msra.mxu0 0.0
        %1307 = vmatpush.msra.mxu0 %v1222
        %1308 = vmatmul.f32.gmra.mxu0 %v1226
        %v1309 = vpop.f32.mrf.mxu0
        %v1310 = vadd.f32 0.0, %v1309
        %1311 = vmatmul.f32.gmra.mxu0 %v1228
        %v1312 = vpop.f32.mrf.mxu0
        %v1313 = vadd.f32 0.0, %v1312
        %1314 = vmatmul.f32.gmra.mxu0 %v1230
        %v1315 = vpop.f32.mrf.mxu0
        %v1316 = vadd.f32 0.0, %v1315
        %1317 = vmatmul.f32.gmra.mxu0 %v1232
        %v1318 = vpop.f32.mrf.mxu0
        %v1319 = vadd.f32 0.0, %v1318
        %1320 = vdwg.mxu0
        %v1321 = vadd.f32 %v1191, %v1252
        %v1322 = vadd.f32 %v1192, %v1281
        %v1323 = vadd.f32 %v1193, %v1310
        %v1324 = vadd.f32 %v1194, %v1255
        %v1325 = vadd.f32 %v1195, %v1284
        %v1326 = vadd.f32 %v1196, %v1313
        %v1327 = vadd.f32 %v1197, %v1258
        %v1328 = vadd.f32 %v1198, %v1287
        %v1329 = vadd.f32 %v1199, %v1316
        %v1330 = vadd.f32 %v1200, %v1261
        %v1331 = vadd.f32 %v1201, %v1290
        %v1332 = vadd.f32 %v1202, %v1319
        %1334 = vset.pattern.permute.xlu0 0
        %1335 = vperm.xlu0 %1334, %v189
        %v1336 = vpop.permute.xlu0 %1335
        %1339 = vset.pattern.permute.xlu0 0
        %1340 = vperm.xlu0 %1339, %v190
        %v1341 = vpop.permute.xlu0 %1340
        %1344 = vset.pattern.permute.xlu0 0
        %1345 = vperm.xlu0 %1344, %v191
        %v1346 = vpop.permute.xlu0 %1345
        %1349 = vset.pattern.permute.xlu0 0
        %1350 = vperm.xlu0 %1349, %v192
        %v1351 = vpop.permute.xlu0 %1350
        %v1353 = vadd.f32 %v1321, %v1336
        %v1354 = vadd.f32 %v1322, %v1336
        %v1355 = vadd.f32 %v1323, %v1336
        %v1356 = vadd.f32 %v1324, %v1341
        %v1357 = vadd.f32 %v1325, %v1341
        %v1358 = vadd.f32 %v1326, %v1341
        %v1359 = vadd.f32 %v1327, %v1346
        %v1360 = vadd.f32 %v1328, %v1346
        %v1361 = vadd.f32 %v1329, %v1346
        %v1362 = vadd.f32 %v1330, %v1351
        %v1363 = vadd.f32 %v1331, %v1351
        %v1364 = vadd.f32 %v1332, %v1351
        %1365 = vst [vmem:[%s188] sm:$0xff] %v1353
        %1366 = vst [vmem:[%s188 + $0x8] sm:$0xff] %v1354
        %1367 = vst [vmem:[%s188 + $0x10] sm:$0xff] %v1355
        %1368 = vst [vmem:[%s188 + $0x18] sm:$0xff] %v1356
        %1369 = vst [vmem:[%s188 + $0x20] sm:$0xff] %v1357
        %1370 = vst [vmem:[%s188 + $0x28] sm:$0xff] %v1358
        %1371 = vst [vmem:[%s188 + $0x30] sm:$0xff] %v1359
        %1372 = vst [vmem:[%s188 + $0x38] sm:$0xff] %v1360
        %1373 = vst [vmem:[%s188 + $0x40] sm:$0xff] %v1361
        %1374 = vst [vmem:[%s188 + $0x48] sm:$0xff] %v1362
        %1375 = vst [vmem:[%s188 + $0x50] sm:$0xff] %v1363
        %1376 = vst [vmem:[%s188 + $0x58] sm:$0xff] %v1364
        %s1377 = sand.u32 %s96, 1
        %s1378 = scalar_lea.sflag [#allocation4], %s1377
        %s1379 = sand.u32 %s96, 1
        %s1380 = smul.addr %s1379, 96
        %s1381 = scalar_lea.vmem [#allocation5], %s1380
        // Predicated region
        $region37: #{tpu_custom_call.1} parent=31 // pred_check
          %p1382 = pneg %p106
        $region38: #{tpu_custom_call.1} parent=31 // pred_check_branch
          %1384 = sbr.rel (%p1382) target = $region40
        $region39: #{tpu_custom_call.1} parent=31 // pred_region
          %1386 = vsyncadd %s1378, 0
          %s1387 = smul.addr %s20, 12
          %s1388 = smul.addr %s1387, 8
          %s1389 = scalar_lea.hbm %s3, %s1388
          %s1390 = sshll.u32 %s1381, 4
          %s1391 = int_to_ptr.vmem [resolvable:$true] %s1390
          %s1392 = sshll.u32 %s1389, 4
          %s1393 = int_to_ptr.hbm [resolvable:$true] %s1392
          %1398 = dma.vmem_to_hbm [thread:$0]  %s1391, 1536, %s1393, %s1378, 384, 384, 24
        $region40: #{tpu_custom_call.1} parent=31 // pred_fallthru
          _
      $region32: #{tpu_custom_call.1} parent=5 // pred_fallthru
        _
      %p1399 = scmp.le.s32.totalorder 2, %s15
      // Predicated region
      $region41: #{tpu_custom_call.1} parent=5 // pred_check
        %p1400 = pneg %p1399
      $region42: #{tpu_custom_call.1} parent=5 // pred_check_branch
        %1402 = sbr.rel (%p1400) target = $region44
      $region43: #{tpu_custom_call.1} parent=5 // pred_region
        %s1403 = ssub.s32 %s15, 2
        // Predicated region
        $region45: #{tpu_custom_call.1} parent=43 // pred_check
          %p1404 = pneg %p112
        $region46: #{tpu_custom_call.1} parent=43 // pred_check_branch
          %1406 = sbr.rel (%p1404) target = $region48
        $region47: #{tpu_custom_call.1} parent=43 // pred_region
          %s1407 = sand.u32 %s97, 1
          %s1408 = scalar_lea.sflag [#allocation4], %s1407
          %s1409 = sand.u32 %s97, 1
          %s1410 = smul.addr %s1409, 96
          %s1411 = scalar_lea.vmem [#allocation5], %s1410
          %1413 = dma.done %s1408, 1536
        $region48: #{tpu_custom_call.1} parent=43 // pred_fallthru
          _
      $region44: #{tpu_custom_call.1} parent=5 // pred_fallthru
        _
    $region6: #{tpu_custom_call.1} parent=1 // loop_footer
      %s19 = sadd.s32 1, %s15
    $region7: #{tpu_custom_call.1} parent=1 // loop_footer_branch
      %14 = sbr.rel target = $region3
    $region8: #{tpu_custom_call.1} parent=1 // loop_exit
      _
    %1414 = vsyncpa [#allocation3], 1
    %s1415 = scalar_lea.sflag [#allocation3], 1
    %1416 = vsyncpa %s1415, 1
    %1417 = vsyncpa [#allocation4], 1
    %s1418 = scalar_lea.sflag [#allocation4], 1
    %1419 = vsyncpa %s1418, 1

</llo_original>
